<compile_context>
chip_gen: v7x
topology: tpu7x:2x2x1
jax: 0.10.0
libtpu: 0.0.40
codegen_flags: <defaults>
</compile_context>

<pallas_src>
import jax
import jax.numpy as jnp
import numpy as np
from jax.experimental import pallas as pl
from jax.experimental.pallas import tpu as pltpu

IN_DIM = 16
OUT_DIM = 8
HIDDEN = 64
SKIP_W = HIDDEN - IN_DIM          # 48 = out_ch of L1 (hidden - in_full_dim)


def _round_up(x, m):
    return ((x + m - 1) // m) * m


def _block_diag(w, p):
    """(k, m) -> (p*k, p*m) block diagonal with p copies of w."""
    if p == 1:
        return w
    k, m = w.shape
    out = jnp.zeros((p, k, p, m), w.dtype)
    for i in range(p):                      # p is 2 or 4; tiny host loop
        out = out.at[i, :, i, :].set(w)
    return out.reshape(p * k, p * m)


def _chip_defaults():
    """(pack, bf16_elementwise_ok) from the detected TPU generation."""
    pack, bf16_ew = 4, True                 # v6e / v7x: 256-wide MXU, bf16 VALU
    try:
        kind = jax.devices()[0].device_kind.lower()
        if any(t in kind for t in ("v2", "v3", "v4", "v5 lite", "v5lite", "v5e")):
            pack, bf16_ew = 2, False        # 128-wide MXU, no bf16 VALU
    except Exception:
        pass
    return pack, bf16_ew


def _skipc_mlp_kernel(x_ref,
                      w0_ref, b0_ref,
                      w1_ref, b1_ref,
                      w2a_ref, w2b_ref, b2_ref,
                      w3_ref, b3_ref,
                      o_ref):
    mm_dtype = w0_ref.dtype                 # MXU operand dtype
    ew_dtype = b0_ref.dtype                 # bias-add / ReLU dtype
    zero = jnp.array(0.0, dtype=ew_dtype)

    def mm(a, w_ref):
        # MXU matmul, f32 accumulation. When ew_dtype == mm_dtype the astype is a no-op.
        return jnp.dot(a.astype(mm_dtype), w_ref[...],
                       preferred_element_type=jnp.float32)

    x0 = x_ref[...]                                        # (tm_p, 16P), mm_dtype

    # L0: Linear(16 -> 64) + ReLU         (packed: 16P -> 64P)
    z = jnp.maximum(mm(x0, w0_ref).astype(ew_dtype) + b0_ref[...], zero)

    # L1: Linear(64 -> 48) + ReLU         (packed: 64P -> 48P)
    z = jnp.maximum(mm(z, w1_ref).astype(ew_dtype) + b1_ref[...], zero)

    # L2: concat([z, x0], -1) @ W2 + b2 == z @ W2[:48] + x0 @ W2[48:] + b2
    # Two dots into a single f32 accumulator (MRB in-place accumulate on v7x).
    acc = mm(z, w2a_ref)
    acc = acc + mm(x0, w2b_ref)
    z = jnp.maximum(acc.astype(ew_dtype) + b2_ref[...], zero)

    # L3: Linear(64 -> 8), last_linear=True -> no activation   (packed: 64P -> 8P)
    z = mm(z, w3_ref).astype(ew_dtype) + b3_ref[...]       # (tm_p, 8P)

    # Lane-dense store: rows map to lanes -> unmasked full-lane vst's.
    # Do the XLU transpose in the narrower of the two dtypes.
    if jnp.dtype(z.dtype).itemsize <= jnp.dtype(o_ref.dtype).itemsize:
        o_ref[...] = jnp.transpose(z).astype(o_ref.dtype)
    else:
        o_ref[...] = jnp.transpose(z.astype(o_ref.dtype))


def skip_cmlp_forward(x, params, *, tm=4096, pack=None,
                      matmul_dtype=jnp.bfloat16, elementwise_dtype=None):
    """x: (..., IN_DIM). Returns (..., OUT_DIM) in x.dtype.

    tm:   logical rows per grid step (sweep 2048..8192; VMEM is not a constraint).
    pack: block-diagonal row-packing factor (rows concatenated along features).
          None -> auto: 4 on v6e/v7x (256-wide MXU), 2 on v5e and older (128-wide).
    matmul_dtype:     MXU operand dtype (bf16 recommended; f32 for exact matmuls).
    elementwise_dtype: bias-add/ReLU dtype. None -> bf16 when the chip has a bf16
          VALU and matmul_dtype is bf16, else f32.
    """
    auto_pack, bf16_ew_ok = _chip_defaults()
    P = auto_pack if pack is None else int(pack)
    mm_dt = jnp.dtype(matmul_dtype)
    if elementwise_dtype is None:
        ew_dt = (jnp.dtype(jnp.bfloat16)
                 if (mm_dt == jnp.dtype(jnp.bfloat16) and bf16_ew_ok)
                 else jnp.dtype(jnp.float32))
    else:
        ew_dt = jnp.dtype(elementwise_dtype)

    lead = x.shape[:-1]
    x2 = x.reshape(-1, IN_DIM)
    n = x2.shape[0]

    # Row tile: multiple of 128*P so the packed input block has full sublanes and
    # the transposed output block is lane-dense. Pad rows with zeros (discarded).
    quantum = 128 * P
    tm_eff = _round_up(min(max(tm, quantum), _round_up(max(n, 1), quantum)), quantum)
    n_pad = _round_up(n, tm_eff)
    if n_pad != n:
        x2 = jnp.pad(x2, ((0, n_pad - n), (0, 0)))

    tm_p = tm_eff // P                                     # packed rows per grid step

    (w0, b0), (w1, b1), (w2, b2), (w3, b3) = params
    # Split W2 so the kernel never concatenates along the lane axis.
    w2a, w2b = w2[:SKIP_W], w2[SKIP_W:]

    # Block-diagonal packed weights (MXU dtype) and tiled biases (elementwise dtype).
    bd = lambda w: _block_diag(w.astype(mm_dt), P)
    tb = lambda b: jnp.tile(b.astype(ew_dt), (1, P))
    w0p, w1p, w2ap, w2bp, w3p = bd(w0), bd(w1), bd(w2a), bd(w2b), bd(w3)
    b0p, b1p, b2p, b3p = tb(b0), tb(b1), tb(b2), tb(b3)

    # Pack P consecutive rows along the feature axis: (n_pad, 16) -> (n_pad/P, 16P).
    x_pk = x2.astype(mm_dt).reshape(n_pad // P, P * IN_DIM)

    def full_spec(a):
        return pl.BlockSpec(a.shape, lambda i: (0,) * a.ndim)

    out_t = pl.pallas_call(
        _skipc_mlp_kernel,
        out_shape=jax.ShapeDtypeStruct((OUT_DIM * P, n_pad // P), x.dtype),
        grid_spec=pltpu.PrefetchScalarGridSpec(
            num_scalar_prefetch=0,
            grid=(n_pad // tm_eff,),
            in_specs=[
                pl.BlockSpec((tm_p, P * IN_DIM), lambda i: (i, 0)),
                full_spec(w0p), full_spec(b0p),
                full_spec(w1p), full_spec(b1p),
                full_spec(w2ap), full_spec(w2bp), full_spec(b2p),
                full_spec(w3p), full_spec(b3p),
            ],
            out_specs=pl.BlockSpec((OUT_DIM * P, tm_p), lambda i: (0, i)),
        ),
        compiler_params=pltpu.CompilerParams(
            # 1-D "parallel" grid shards across v7x's two TensorCores.
            # TODO(synk): if an xprof trace shows one v7x TC idle, add an explicit
            # leading size-2 grid axis marked pltpu.CORE_PARALLEL and split rows.
            dimension_semantics=("parallel",),
            vmem_limit_bytes=32 * 1024 * 1024,   # headroom for large-tm sweeps
        ),
    )(x_pk, w0p, b0p, w1p, b1p, w2ap, w2bp, b2p, w3p, b3p)

    # (8P, n_pad/P) -> (n_pad/P, 8P) -> (n_pad, 8), drop padded rows.
    out = out_t.T.reshape(n_pad, OUT_DIM)[:n]
    return out.reshape(*lead, OUT_DIM)


def init_params(key):
    """PyTorch-Linear-style init: U(-1/sqrt(fan_in), 1/sqrt(fan_in)).
    Weights stored (in_ch, out_ch) (transposed vs nn.Linear); biases (1, out_ch)."""
    dims = [
        (IN_DIM, HIDDEN),    # L0
        (HIDDEN, SKIP_W),    # L1 (i == skipc_layer_idx - 1 -> out_ch - in_full_dim)
        (HIDDEN, HIDDEN),    # L2 (input is concat(z, x0) = 48 + 16)
        (HIDDEN, OUT_DIM),   # L3
    ]
    params = []
    for (fan_in, fan_out) in dims:
        key, kw, kb = jax.random.split(key, 3)
        bound = 1.0 / np.sqrt(fan_in)
        w = jax.random.uniform(kw, (fan_in, fan_out), jnp.float32, -bound, bound)
        b = jax.random.uniform(kb, (1, fan_out), jnp.float32, -bound, bound)
        params.append((w, b))
    return params


def reference_forward(x, params):
    """Pure-JAX reference mirroring the PyTorch forward (with the concat)."""
    (w0, b0), (w1, b1), (w2, b2), (w3, b3) = params
    lead = x.shape[:-1]
    x0 = x.reshape(-1, IN_DIM)
    z = jnp.maximum(x0 @ w0 + b0, 0.0)
    z = jnp.maximum(z @ w1 + b1, 0.0)
    z = jnp.concatenate([z, x0], axis=-1)    # skip connection at layer idx 2
    z = jnp.maximum(z @ w2 + b2, 0.0)
    z = z @ w3 + b3                           # last_linear=True
    return z.reshape(*lead, OUT_DIM)


if __name__ == "__main__":
    key = jax.random.PRNGKey(0)
    key, kx, kx2 = jax.random.split(key, 3)
    params = init_params(key)

    # Small input: batch=2, seq=8, features=IN_DIM (16 rows, one padded tile).
    x = jax.random.normal(kx, (2, 8, IN_DIM), jnp.float32)
    y_ref = reference_forward(x, params)

    # Default path: bf16 MXU operands (+bf16 elementwise on v6e/v7x), auto packing.
    y_bf16 = jax.block_until_ready(skip_cmlp_forward(x, params))
    np.testing.assert_allclose(np.asarray(y_bf16), np.asarray(y_ref),
                               rtol=7.5e-2, atol=7.5e-2)

    # Exact f32-operand path matches the reference tightly.
    y_f32 = jax.block_until_ready(
        skip_cmlp_forward(x, params, matmul_dtype=jnp.float32,
                          elementwise_dtype=jnp.float32))
    np.testing.assert_allclose(np.asarray(y_f32), np.asarray(y_ref),
                               rtol=1e-4, atol=1e-4)

    # Packing-factor override (P=2, v5e layout) — checks the block-diag math.
    y_p2 = jax.block_until_ready(
        skip_cmlp_forward(x, params, pack=2, matmul_dtype=jnp.float32,
                          elementwise_dtype=jnp.float32))
    np.testing.assert_allclose(np.asarray(y_p2), np.asarray(y_ref),
                               rtol=1e-4, atol=1e-4)

    # Multi-step grid + row padding (1000 rows, small tm forces >=2 grid steps).
    xg = jax.random.normal(kx2, (4, 250, IN_DIM), jnp.float32)
    yg_ref = reference_forward(xg, params)
    yg = jax.block_until_ready(
        skip_cmlp_forward(xg, params, tm=256, matmul_dtype=jnp.float32,
                          elementwise_dtype=jnp.float32))
    np.testing.assert_allclose(np.asarray(yg), np.asarray(yg_ref),
                               rtol=1e-4, atol=1e-4)

    print("KERNEL_OK")
</pallas_src>

<mosaic_0001>
module attributes {stable_mosaic.version = 11 : i64} {
  func.func @_skipc_mlp_kernel(%arg0: i32, %arg1: memref<128x64xbf16, #tpu.memory_space<vmem>>, %arg2: memref<64x256xbf16, #tpu.memory_space<vmem>>, %arg3: memref<1x256xbf16, #tpu.memory_space<vmem>>, %arg4: memref<256x192xbf16, #tpu.memory_space<vmem>>, %arg5: memref<1x192xbf16, #tpu.memory_space<vmem>>, %arg6: memref<192x256xbf16, #tpu.memory_space<vmem>>, %arg7: memref<64x256xbf16, #tpu.memory_space<vmem>>, %arg8: memref<1x256xbf16, #tpu.memory_space<vmem>>, %arg9: memref<256x32xbf16, #tpu.memory_space<vmem>>, %arg10: memref<1x32xbf16, #tpu.memory_space<vmem>>, %arg11: memref<32x128xf32, #tpu.memory_space<vmem>>) attributes {dimension_semantics = [#tpu.dimension_semantics<parallel>], iteration_bounds = array<i64: 1>, scalar_prefetch = 0 : i64, scratch_operands = 0 : i64, tpu.core_type = #tpu.core_type<tc>, window_params = [{transform_indices = @transform_0, window_bounds = array<i64: 128, 64>}, {pipeline_mode = #tpu.pipeline_mode<synchronous>, transform_indices = @transform_1, window_bounds = array<i64: 64, 256>}, {pipeline_mode = #tpu.pipeline_mode<synchronous>, transform_indices = @transform_2, window_bounds = array<i64: 1, 256>}, {pipeline_mode = #tpu.pipeline_mode<synchronous>, transform_indices = @transform_3, window_bounds = array<i64: 256, 192>}, {pipeline_mode = #tpu.pipeline_mode<synchronous>, transform_indices = @transform_4, window_bounds = array<i64: 1, 192>}, {pipeline_mode = #tpu.pipeline_mode<synchronous>, transform_indices = @transform_5, window_bounds = array<i64: 192, 256>}, {pipeline_mode = #tpu.pipeline_mode<synchronous>, transform_indices = @transform_6, window_bounds = array<i64: 64, 256>}, {pipeline_mode = #tpu.pipeline_mode<synchronous>, transform_indices = @transform_7, window_bounds = array<i64: 1, 256>}, {pipeline_mode = #tpu.pipeline_mode<synchronous>, transform_indices = @transform_8, window_bounds = array<i64: 256, 32>}, {pipeline_mode = #tpu.pipeline_mode<synchronous>, transform_indices = @transform_9, window_bounds = array<i64: 1, 32>}, {transform_indices = @transform_10, window_bounds = array<i64: 32, 128>}]} {
    %c0 = arith.constant 0 : index
    %c0_0 = arith.constant 0 : index
    %0 = vector.load %arg1[%c0, %c0_0] : memref<128x64xbf16, #tpu.memory_space<vmem>>, vector<128x64xbf16>
    %c0_1 = arith.constant 0 : index
    %c0_2 = arith.constant 0 : index
    %1 = vector.load %arg2[%c0_1, %c0_2] : memref<64x256xbf16, #tpu.memory_space<vmem>>, vector<64x256xbf16>
    %cst = arith.constant dense<0.000000e+00> : vector<128x256xf32>
    %2 = tpu.matmul %0, %1, %cst {dimension_numbers = #tpu.dot_dimension_numbers<[1], [0], [0], [1], [0, 0, 1, 1], [], []>} : vector<128x64xbf16>, vector<64x256xbf16>, vector<128x256xf32> -> vector<128x256xf32>
    %3 = arith.truncf %2 : vector<128x256xf32> to vector<128x256xbf16>
    %c0_3 = arith.constant 0 : index
    %c0_4 = arith.constant 0 : index
    %4 = vector.load %arg3[%c0_3, %c0_4] : memref<1x256xbf16, #tpu.memory_space<vmem>>, vector<1x256xbf16>
    %5 = vector.broadcast %4 : vector<1x256xbf16> to vector<128x256xbf16>
    %6 = arith.addf %3, %5 : vector<128x256xbf16>
    %cst_5 = arith.constant 0.000000e+00 : bf16
    %7 = vector.broadcast %cst_5 : bf16 to vector<128x256xbf16>
    %8 = arith.maximumf %6, %7 : vector<128x256xbf16>
    %c0_6 = arith.constant 0 : index
    %c0_7 = arith.constant 0 : index
    %9 = vector.load %arg4[%c0_6, %c0_7] : memref<256x192xbf16, #tpu.memory_space<vmem>>, vector<256x192xbf16>
    %cst_8 = arith.constant dense<0.000000e+00> : vector<128x192xf32>
    %10 = tpu.matmul %8, %9, %cst_8 {dimension_numbers = #tpu.dot_dimension_numbers<[1], [0], [0], [1], [0, 0, 1, 1], [], []>} : vector<128x256xbf16>, vector<256x192xbf16>, vector<128x192xf32> -> vector<128x192xf32>
    %11 = arith.truncf %10 : vector<128x192xf32> to vector<128x192xbf16>
    %c0_9 = arith.constant 0 : index
    %c0_10 = arith.constant 0 : index
    %12 = vector.load %arg5[%c0_9, %c0_10] : memref<1x192xbf16, #tpu.memory_space<vmem>>, vector<1x192xbf16>
    %13 = vector.broadcast %12 : vector<1x192xbf16> to vector<128x192xbf16>
    %14 = arith.addf %11, %13 : vector<128x192xbf16>
    %cst_11 = arith.constant 0.000000e+00 : bf16
    %15 = vector.broadcast %cst_11 : bf16 to vector<128x192xbf16>
    %16 = arith.maximumf %14, %15 : vector<128x192xbf16>
    %c0_12 = arith.constant 0 : index
    %c0_13 = arith.constant 0 : index
    %17 = vector.load %arg6[%c0_12, %c0_13] : memref<192x256xbf16, #tpu.memory_space<vmem>>, vector<192x256xbf16>
    %cst_14 = arith.constant dense<0.000000e+00> : vector<128x256xf32>
    %18 = tpu.matmul %16, %17, %cst_14 {dimension_numbers = #tpu.dot_dimension_numbers<[1], [0], [0], [1], [0, 0, 1, 1], [], []>} : vector<128x192xbf16>, vector<192x256xbf16>, vector<128x256xf32> -> vector<128x256xf32>
    %c0_15 = arith.constant 0 : index
    %c0_16 = arith.constant 0 : index
    %19 = vector.load %arg7[%c0_15, %c0_16] : memref<64x256xbf16, #tpu.memory_space<vmem>>, vector<64x256xbf16>
    %cst_17 = arith.constant dense<0.000000e+00> : vector<128x256xf32>
    %20 = tpu.matmul %0, %19, %cst_17 {dimension_numbers = #tpu.dot_dimension_numbers<[1], [0], [0], [1], [0, 0, 1, 1], [], []>} : vector<128x64xbf16>, vector<64x256xbf16>, vector<128x256xf32> -> vector<128x256xf32>
    %21 = arith.addf %18, %20 : vector<128x256xf32>
    %22 = arith.truncf %21 : vector<128x256xf32> to vector<128x256xbf16>
    %c0_18 = arith.constant 0 : index
    %c0_19 = arith.constant 0 : index
    %23 = vector.load %arg8[%c0_18, %c0_19] : memref<1x256xbf16, #tpu.memory_space<vmem>>, vector<1x256xbf16>
    %24 = vector.broadcast %23 : vector<1x256xbf16> to vector<128x256xbf16>
    %25 = arith.addf %22, %24 : vector<128x256xbf16>
    %cst_20 = arith.constant 0.000000e+00 : bf16
    %26 = vector.broadcast %cst_20 : bf16 to vector<128x256xbf16>
    %27 = arith.maximumf %25, %26 : vector<128x256xbf16>
    %c0_21 = arith.constant 0 : index
    %c0_22 = arith.constant 0 : index
    %28 = vector.load %arg9[%c0_21, %c0_22] : memref<256x32xbf16, #tpu.memory_space<vmem>>, vector<256x32xbf16>
    %cst_23 = arith.constant dense<0.000000e+00> : vector<128x32xf32>
    %29 = tpu.matmul %27, %28, %cst_23 {dimension_numbers = #tpu.dot_dimension_numbers<[1], [0], [0], [1], [0, 0, 1, 1], [], []>} : vector<128x256xbf16>, vector<256x32xbf16>, vector<128x32xf32> -> vector<128x32xf32>
    %30 = arith.truncf %29 : vector<128x32xf32> to vector<128x32xbf16>
    %c0_24 = arith.constant 0 : index
    %c0_25 = arith.constant 0 : index
    %31 = vector.load %arg10[%c0_24, %c0_25] : memref<1x32xbf16, #tpu.memory_space<vmem>>, vector<1x32xbf16>
    %32 = vector.broadcast %31 : vector<1x32xbf16> to vector<128x32xbf16>
    %33 = arith.addf %30, %32 : vector<128x32xbf16>
    %34 = tpu.transpose %33, [1, 0] : vector<128x32xbf16> -> vector<32x128xbf16>
    %35 = arith.extf %34 : vector<32x128xbf16> to vector<32x128xf32>
    %c0_26 = arith.constant 0 : index
    %c0_27 = arith.constant 0 : index
    %36 = vector.load %arg11[%c0_26, %c0_27] : memref<32x128xf32, #tpu.memory_space<vmem>>, vector<32x128xf32>
    tpu.vector_store %arg11[%c0_26, %c0_27], %35 {strides = array<i32>} : memref<32x128xf32, #tpu.memory_space<vmem>>, vector<32x128xf32>,
    return
  }
  func.func @transform_0(%arg0: i32) -> (i32, i32) {
    %c0_i32 = arith.constant 0 : i32
    %c0_i32_0 = arith.constant 0 : i32
    return %arg0, %c0_i32 : i32, i32
  }
  func.func @transform_1(%arg0: i32) -> (i32, i32) {
    %c0_i32 = arith.constant 0 : i32
    %c0_i32_0 = arith.constant 0 : i32
    %c0_i32_1 = arith.constant 0 : i32
    return %c0_i32, %c0_i32_0 : i32, i32
  }
  func.func @transform_2(%arg0: i32) -> (i32, i32) {
    %c0_i32 = arith.constant 0 : i32
    %c0_i32_0 = arith.constant 0 : i32
    %c0_i32_1 = arith.constant 0 : i32
    return %c0_i32, %c0_i32_0 : i32, i32
  }
  func.func @transform_3(%arg0: i32) -> (i32, i32) {
    %c0_i32 = arith.constant 0 : i32
    %c0_i32_0 = arith.constant 0 : i32
    %c0_i32_1 = arith.constant 0 : i32
    return %c0_i32, %c0_i32_0 : i32, i32
  }
  func.func @transform_4(%arg0: i32) -> (i32, i32) {
    %c0_i32 = arith.constant 0 : i32
    %c0_i32_0 = arith.constant 0 : i32
    %c0_i32_1 = arith.constant 0 : i32
    return %c0_i32, %c0_i32_0 : i32, i32
  }
  func.func @transform_5(%arg0: i32) -> (i32, i32) {
    %c0_i32 = arith.constant 0 : i32
    %c0_i32_0 = arith.constant 0 : i32
    %c0_i32_1 = arith.constant 0 : i32
    return %c0_i32, %c0_i32_0 : i32, i32
  }
  func.func @transform_6(%arg0: i32) -> (i32, i32) {
    %c0_i32 = arith.constant 0 : i32
    %c0_i32_0 = arith.constant 0 : i32
    %c0_i32_1 = arith.constant 0 : i32
    return %c0_i32, %c0_i32_0 : i32, i32
  }
  func.func @transform_7(%arg0: i32) -> (i32, i32) {
    %c0_i32 = arith.constant 0 : i32
    %c0_i32_0 = arith.constant 0 : i32
    %c0_i32_1 = arith.constant 0 : i32
    return %c0_i32, %c0_i32_0 : i32, i32
  }
  func.func @transform_8(%arg0: i32) -> (i32, i32) {
    %c0_i32 = arith.constant 0 : i32
    %c0_i32_0 = arith.constant 0 : i32
    %c0_i32_1 = arith.constant 0 : i32
    return %c0_i32, %c0_i32_0 : i32, i32
  }
  func.func @transform_9(%arg0: i32) -> (i32, i32) {
    %c0_i32 = arith.constant 0 : i32
    %c0_i32_0 = arith.constant 0 : i32
    %c0_i32_1 = arith.constant 0 : i32
    return %c0_i32, %c0_i32_0 : i32, i32
  }
  func.func @transform_10(%arg0: i32) -> (i32, i32) {
    %c0_i32 = arith.constant 0 : i32
    %c0_i32_0 = arith.constant 0 : i32
    return %c0_i32, %arg0 : i32, i32
  }
}

</mosaic_0001>

<llo_original>
// kernel: tpu_custom_call.1
$region0: #{tpu_custom_call.1}
  #allocation0 [shape = 'u32[]', space=smem, size = 0x4, offset = 0x4, fixed_abs, tag = 'smem constant byte address 0x4 - core index']
  #allocation1 [shape = 'u32[144,128]{1,0:T(1,128)}', space=vmem, size = 0x12000, scoped, tag = 'internal scratch']
  %s0 = inlined_call_operand.vmem [shape: bf16[128,64], index: 0, kind: input, shape index: {}]
  %s1 = inlined_call_operand.vmem [shape: bf16[64,256], index: 1, kind: input, shape index: {}]
  %s2 = inlined_call_operand.vmem [shape: bf16[1,256], index: 2, kind: input, shape index: {}]
  %s3 = inlined_call_operand.vmem [shape: bf16[256,192], index: 3, kind: input, shape index: {}]
  %s4 = inlined_call_operand.vmem [shape: bf16[1,192], index: 4, kind: input, shape index: {}]
  %s5 = inlined_call_operand.vmem [shape: bf16[192,256], index: 5, kind: input, shape index: {}]
  %s6 = inlined_call_operand.vmem [shape: bf16[64,256], index: 6, kind: input, shape index: {}]
  %s7 = inlined_call_operand.vmem [shape: bf16[1,256], index: 7, kind: input, shape index: {}]
  %s8 = inlined_call_operand.vmem [shape: bf16[256,32], index: 8, kind: input, shape index: {}]
  %s9 = inlined_call_operand.vmem [shape: bf16[1,32], index: 9, kind: input, shape index: {}]
  %s10 = inlined_call_operand.hbm [shape: f32[32,128], index: 10, kind: output, shape index: {}]
  %s11 = sld [smem:[#allocation0]]
  $region50: #{tpu_custom_call.1} parent=0
    _
  %s13 = ssub.s32 1, %s11
  %s14 = scalar_select 0, %s13, %s11
  $region1: #{tpu_custom_call.1} parent=0
    #allocation2 [shape = 'u8[16384]{0}', space=vmem, size = 0x4000, scoped, tag = 'output window, operand 0, single buffered']
    #allocation3 [shape = 's32[1]{0}', space=sflag, size = 0x4, scoped, tag = 'scoped memory for tpu_custom_call.1']
    %15 = vsyncpa [#allocation3], 0
    // Predicated region
    $region2: #{tpu_custom_call.1} parent=1 // pred_check
      _
    $region3: #{tpu_custom_call.1} parent=1 // pred_check_branch
      %17 = sbr.rel (0) target = $region5
    $region4: #{tpu_custom_call.1} parent=1 // pred_region
      _
    $region5: #{tpu_custom_call.1} parent=1 // pred_fallthru
      _
    // Predicated region
    $region6: #{tpu_custom_call.1} parent=1 // pred_check
      _
    $region7: #{tpu_custom_call.1} parent=1 // pred_check_branch
      %19 = sbr.rel (0) target = $region9
    $region8: #{tpu_custom_call.1} parent=1 // pred_region
      _
    $region9: #{tpu_custom_call.1} parent=1 // pred_fallthru
      _
    // Predicated region
    $region10: #{tpu_custom_call.1} parent=1 // pred_check
      _
    $region11: #{tpu_custom_call.1} parent=1 // pred_check_branch
      %21 = sbr.rel (0) target = $region13
    $region12: #{tpu_custom_call.1} parent=1 // pred_region
      _
    $region13: #{tpu_custom_call.1} parent=1 // pred_fallthru
      _
    // Predicated region
    $region14: #{tpu_custom_call.1} parent=1 // pred_check
      _
    $region15: #{tpu_custom_call.1} parent=1 // pred_check_branch
      %23 = sbr.rel (0) target = $region17
    $region16: #{tpu_custom_call.1} parent=1 // pred_region
      _
    $region17: #{tpu_custom_call.1} parent=1 // pred_fallthru
      _
    // Predicated region
    $region18: #{tpu_custom_call.1} parent=1 // pred_check
      _
    $region19: #{tpu_custom_call.1} parent=1 // pred_check_branch
      %25 = sbr.rel (0) target = $region21
    $region20: #{tpu_custom_call.1} parent=1 // pred_region
      _
    $region21: #{tpu_custom_call.1} parent=1 // pred_fallthru
      _
    // Predicated region
    $region22: #{tpu_custom_call.1} parent=1 // pred_check
      _
    $region23: #{tpu_custom_call.1} parent=1 // pred_check_branch
      %27 = sbr.rel (0) target = $region25
    $region24: #{tpu_custom_call.1} parent=1 // pred_region
      _
    $region25: #{tpu_custom_call.1} parent=1 // pred_fallthru
      _
    // Predicated region
    $region26: #{tpu_custom_call.1} parent=1 // pred_check
      _
    $region27: #{tpu_custom_call.1} parent=1 // pred_check_branch
      %29 = sbr.rel (0) target = $region29
    $region28: #{tpu_custom_call.1} parent=1 // pred_region
      _
    $region29: #{tpu_custom_call.1} parent=1 // pred_fallthru
      _
    // Predicated region
    $region30: #{tpu_custom_call.1} parent=1 // pred_check
      _
    $region31: #{tpu_custom_call.1} parent=1 // pred_check_branch
      %31 = sbr.rel (0) target = $region33
    $region32: #{tpu_custom_call.1} parent=1 // pred_region
      _
    $region33: #{tpu_custom_call.1} parent=1 // pred_fallthru
      _
    // Predicated region
    $region34: #{tpu_custom_call.1} parent=1 // pred_check
      _
    $region35: #{tpu_custom_call.1} parent=1 // pred_check_branch
      %33 = sbr.rel (0) target = $region37
    $region36: #{tpu_custom_call.1} parent=1 // pred_region
      _
    $region37: #{tpu_custom_call.1} parent=1 // pred_fallthru
      _
    // Predicated region
    $region38: #{tpu_custom_call.1} parent=1 // pred_check
      _
    $region39: #{tpu_custom_call.1} parent=1 // pred_check_branch
      %35 = sbr.rel (0) target = $region41
    $region40: #{tpu_custom_call.1} parent=1 // pred_region
      _
    $region41: #{tpu_custom_call.1} parent=1 // pred_fallthru
      _
    %v37 = vld [vmem:[%s0] sm:$0xf]
    %v38 = vld [vmem:[%s0 + $0x4] sm:$0xf]
    %v39 = vld [vmem:[%s0 + $0x8] sm:$0xf]
    %v40 = vld [vmem:[%s0 + $0xc] sm:$0xf]
    %v41 = vld [vmem:[%s0 + $0x10] sm:$0xf]
    %v42 = vld [vmem:[%s0 + $0x14] sm:$0xf]
    %v43 = vld [vmem:[%s0 + $0x18] sm:$0xf]
    %v44 = vld [vmem:[%s0 + $0x1c] sm:$0xf]
    %v45 = vld [vmem:[%s0 + $0x20] sm:$0xf]
    %v46 = vld [vmem:[%s0 + $0x24] sm:$0xf]
    %v47 = vld [vmem:[%s0 + $0x28] sm:$0xf]
    %v48 = vld [vmem:[%s0 + $0x2c] sm:$0xf]
    %v49 = vld [vmem:[%s0 + $0x30] sm:$0xf]
    %v50 = vld [vmem:[%s0 + $0x34] sm:$0xf]
    %v51 = vld [vmem:[%s0 + $0x38] sm:$0xf]
    %v52 = vld [vmem:[%s0 + $0x3c] sm:$0xf]
    %v53 = vld [vmem:[%s1] sm:$0xff]
    %v54 = vld [vmem:[%s1 + $0x8] sm:$0xff]
    %v55 = vld [vmem:[%s1 + $0x10] sm:$0xff]
    %v56 = vld [vmem:[%s1 + $0x18] sm:$0xff]
    %v57 = vld [vmem:[%s1 + $0x20] sm:$0xff]
    %v58 = vld [vmem:[%s1 + $0x28] sm:$0xff]
    %v59 = vld [vmem:[%s1 + $0x30] sm:$0xff]
    %v60 = vld [vmem:[%s1 + $0x38] sm:$0xff]
    %v77 = vunpack.c.l.b16 %v37
    %v78 = vunpack.c.l.b16 %v38
    %v79 = vunpack.c.l.b16 %v39
    %v80 = vunpack.c.l.b16 %v40
    %v81 = vunpack.c.l.b16 %v41
    %v82 = vunpack.c.l.b16 %v42
    %v83 = vunpack.c.l.b16 %v43
    %v84 = vunpack.c.l.b16 %v44
    %v85 = vunpack.c.l.b16 %v45
    %v86 = vunpack.c.l.b16 %v46
    %v87 = vunpack.c.l.b16 %v47
    %v88 = vunpack.c.l.b16 %v48
    %v89 = vunpack.c.l.b16 %v49
    %v90 = vunpack.c.l.b16 %v50
    %v91 = vunpack.c.l.b16 %v51
    %v92 = vunpack.c.l.b16 %v52
    %v93 = vpack.c.b16 %v78, %v77
    %v94 = vpack.c.b16 %v80, %v79
    %v95 = vpack.c.b16 %v82, %v81
    %v96 = vpack.c.b16 %v84, %v83
    %v97 = vpack.c.b16 %v86, %v85
    %v98 = vpack.c.b16 %v88, %v87
    %v99 = vpack.c.b16 %v90, %v89
    %v100 = vpack.c.b16 %v92, %v91
    %v109 = vunpack.c.l.b16 %v53
    %v110 = vunpack.c.h.b16 %v53
    %v111 = vunpack.c.l.b16 %v54
    %v112 = vunpack.c.h.b16 %v54
    %v113 = vunpack.c.l.b16 %v55
    %v114 = vunpack.c.h.b16 %v55
    %v115 = vunpack.c.l.b16 %v56
    %v116 = vunpack.c.h.b16 %v56
    %v117 = vunpack.c.l.b16 %v57
    %v118 = vunpack.c.h.b16 %v57
    %v119 = vunpack.c.l.b16 %v58
    %v120 = vunpack.c.h.b16 %v58
    %v121 = vunpack.c.l.b16 %v59
    %v122 = vunpack.c.h.b16 %v59
    %v123 = vunpack.c.l.b16 %v60
    %v124 = vunpack.c.h.b16 %v60
    %v125 = vpack.c.b16 %v111, %v109
    %v126 = vpack.c.b16 %v112, %v110
    %v127 = vpack.c.b16 %v115, %v113
    %v128 = vpack.c.b16 %v116, %v114
    %v129 = vpack.c.b16 %v119, %v117
    %v130 = vpack.c.b16 %v120, %v118
    %v131 = vpack.c.b16 %v123, %v121
    %v132 = vpack.c.b16 %v124, %v122
    %vm141 = vcmask 523264
    %v143 = vsel %vm141, %v93, 0
    %v146 = vsel %vm141, %v94, 0
    %v149 = vsel %vm141, %v95, 0
    %v152 = vsel %vm141, %v96, 0
    %v155 = vsel %vm141, %v97, 0
    %v158 = vsel %vm141, %v98, 0
    %v161 = vsel %vm141, %v99, 0
    %v164 = vsel %vm141, %v100, 0
    %166 = vmatprep.subr.bf16.mxu0 %v126
    %167 = vmatpush1.bf16.msra.mxu0 %v125
    %168 = vmatprep.subr.bf16.mxu0 %v128
    %169 = vmatpush1.bf16.msra.mxu0 %v127
    %170 = vmatprep.subr.bf16.mxu0 %v130
    %171 = vmatpush1.bf16.msra.mxu0 %v129
    %172 = vmatprep.subr.bf16.mxu0 %v132
    %173 = vmatpush1.bf16.msra.mxu0 %v131
    %174 = vmatprep.subr.bf16.mxu0 0
    %175 = vmatpush1.bf16.msra.mxu0 0
    %176 = vmatprep.subr.bf16.mxu0 0
    %177 = vmatpush1.bf16.msra.mxu0 0
    %178 = vmatprep.subr.bf16.mxu0 0
    %179 = vmatpush1.bf16.msra.mxu0 0
    %180 = vmatprep.subr.bf16.mxu0 0
    %181 = vmatpush1.bf16.msra.mxu0 0
    %182 = vmatprep.subr.bf16.mxu0 0
    %183 = vmatpush1.bf16.msra.mxu0 0
    %184 = vmatprep.subr.bf16.mxu0 0
    %185 = vmatpush1.bf16.msra.mxu0 0
    %186 = vmatprep.subr.bf16.mxu0 0
    %187 = vmatpush1.bf16.msra.mxu0 0
    %188 = vmatprep.subr.bf16.mxu0 0
    %189 = vmatpush1.bf16.msra.mxu0 0
    %190 = vmatprep.subr.bf16.mxu0 0
    %191 = vmatpush1.bf16.msra.mxu0 0
    %192 = vmatprep.subr.bf16.mxu0 0
    %193 = vmatpush1.bf16.msra.mxu0 0
    %194 = vmatprep.subr.bf16.mxu0 0
    %195 = vmatpush1.bf16.msra.mxu0 0
    %196 = vmatprep.subr.bf16.mxu0 0
    %197 = vmatpush1.bf16.msra.mxu0 0
    %198 = vmatprep.mubr.bf16.mxu0 0
    %199 = vmatmul.mubr.bf16.gmra.mrb[0].mxu0 %v143
    %v200 = vpop.f32.mrb[0].mxu0
    %v201 = vadd.f32 0.0, %v200
    %v202 = vpop.f32.mrb[0].mxu0
    %v203 = vadd.f32 0.0, %v202
    %v204 = vpop.f32.mrb[0].mxu0
    %v205 = vadd.f32 0.0, %v204
    %v206 = vpop.f32.mrb[0].mxu0
    %v207 = vadd.f32 0.0, %v206
    %208 = vmatprep.mubr.bf16.mxu0 0
    %209 = vmatmul.mubr.bf16.gmra.mrb[0].mxu0 %v146
    %v210 = vpop.f32.mrb[0].mxu0
    %v211 = vadd.f32 0.0, %v210
    %v212 = vpop.f32.mrb[0].mxu0
    %v213 = vadd.f32 0.0, %v212
    %v214 = vpop.f32.mrb[0].mxu0
    %v215 = vadd.f32 0.0, %v214
    %v216 = vpop.f32.mrb[0].mxu0
    %v217 = vadd.f32 0.0, %v216
    %218 = vmatprep.mubr.bf16.mxu0 0
    %219 = vmatmul.mubr.bf16.gmra.mrb[0].mxu0 %v149
    %v220 = vpop.f32.mrb[0].mxu0
    %v221 = vadd.f32 0.0, %v220
    %v222 = vpop.f32.mrb[0].mxu0
    %v223 = vadd.f32 0.0, %v222
    %v224 = vpop.f32.mrb[0].mxu0
    %v225 = vadd.f32 0.0, %v224
    %v226 = vpop.f32.mrb[0].mxu0
    %v227 = vadd.f32 0.0, %v226
    %228 = vmatprep.mubr.bf16.mxu0 0
    %229 = vmatmul.mubr.bf16.gmra.mrb[0].mxu0 %v152
    %v230 = vpop.f32.mrb[0].mxu0
    %v231 = vadd.f32 0.0, %v230
    %v232 = vpop.f32.mrb[0].mxu0
    %v233 = vadd.f32 0.0, %v232
    %v234 = vpop.f32.mrb[0].mxu0
    %v235 = vadd.f32 0.0, %v234
    %v236 = vpop.f32.mrb[0].mxu0
    %v237 = vadd.f32 0.0, %v236
    %238 = vmatprep.mubr.bf16.mxu0 0
    %239 = vmatmul.mubr.bf16.gmra.mrb[0].mxu0 %v155
    %v240 = vpop.f32.mrb[0].mxu0
    %v241 = vadd.f32 0.0, %v240
    %v242 = vpop.f32.mrb[0].mxu0
    %v243 = vadd.f32 0.0, %v242
    %v244 = vpop.f32.mrb[0].mxu0
    %v245 = vadd.f32 0.0, %v244
    %v246 = vpop.f32.mrb[0].mxu0
    %v247 = vadd.f32 0.0, %v246
    %248 = vmatprep.mubr.bf16.mxu0 0
    %249 = vmatmul.mubr.bf16.gmra.mrb[0].mxu0 %v158
    %v250 = vpop.f32.mrb[0].mxu0
    %v251 = vadd.f32 0.0, %v250
    %v252 = vpop.f32.mrb[0].mxu0
    %v253 = vadd.f32 0.0, %v252
    %v254 = vpop.f32.mrb[0].mxu0
    %v255 = vadd.f32 0.0, %v254
    %v256 = vpop.f32.mrb[0].mxu0
    %v257 = vadd.f32 0.0, %v256
    %258 = vmatprep.mubr.bf16.mxu0 0
    %259 = vmatmul.mubr.bf16.gmra.mrb[0].mxu0 %v161
    %v260 = vpop.f32.mrb[0].mxu0
    %v261 = vadd.f32 0.0, %v260
    %v262 = vpop.f32.mrb[0].mxu0
    %v263 = vadd.f32 0.0, %v262
    %v264 = vpop.f32.mrb[0].mxu0
    %v265 = vadd.f32 0.0, %v264
    %v266 = vpop.f32.mrb[0].mxu0
    %v267 = vadd.f32 0.0, %v266
    %268 = vmatprep.mubr.bf16.mxu0 0
    %269 = vmatmul.mubr.bf16.gmra.mrb[0].mxu0 %v164
    %v270 = vpop.f32.mrb[0].mxu0
    %v271 = vadd.f32 0.0, %v270
    %v272 = vpop.f32.mrb[0].mxu0
    %v273 = vadd.f32 0.0, %v272
    %v274 = vpop.f32.mrb[0].mxu0
    %v275 = vadd.f32 0.0, %v274
    %v276 = vpop.f32.mrb[0].mxu0
    %v277 = vadd.f32 0.0, %v276
    %278 = vdwg.mxu0
    %v279 = vpack.c.bf16 %v205, %v201
    %v280 = vpack.c.bf16 %v207, %v203
    %v281 = vpack.c.bf16 %v215, %v211
    %v282 = vpack.c.bf16 %v217, %v213
    %v283 = vpack.c.bf16 %v225, %v221
    %v284 = vpack.c.bf16 %v227, %v223
    %v285 = vpack.c.bf16 %v235, %v231
    %v286 = vpack.c.bf16 %v237, %v233
    %v287 = vpack.c.bf16 %v245, %v241
    %v288 = vpack.c.bf16 %v247, %v243
    %v289 = vpack.c.bf16 %v255, %v251
    %v290 = vpack.c.bf16 %v257, %v253
    %v291 = vpack.c.bf16 %v265, %v261
    %v292 = vpack.c.bf16 %v267, %v263
    %v293 = vpack.c.bf16 %v275, %v271
    %v294 = vpack.c.bf16 %v277, %v273
    %v295 = vld [vmem:[%s2] sm:$0x3]
    %v298 = vunpack.c.l.s4 1966171168
    %v299 = vunpack.c.0.s8 %v298
    %v300 = vlaneseq
    %v301 = vshrl.u32 %v300, 7
    %v302 = vsub.s32 %v299, %v301
    %v303 = vrot.slane %v295, %v302
    %v304 = vcombine.high %v303, %v303
    %v306 = vunpack.c.l.s4 1966171168
    %v307 = vunpack.c.0.s8 %v306
    %v308 = vlaneseq
    %v309 = vshrl.u32 %v308, 7
    %v310 = vsub.s32 %v307, %v309
    %v311 = vrot.slane %v303, %v310
    %v313 = vunpack.c.l.s4 1966171168
    %v314 = vunpack.c.0.s8 %v313
    %v315 = vlaneseq
    %v316 = vshrl.u32 %v315, 7
    %v317 = vsub.s32 %v314, %v316
    %v318 = vrot.slane %v304, %v317
    %v320 = vpack.i.b16 %v311, %v311
    %v322 = vlaneseq
    %v323 = vshrl.u32 %v322, 7
    %v324 = vsub.s32 0, %v323
    %v325 = vrot.slane %v320, %v324
    %v327 = vpack.i.b16 %v318, %v318
    %v329 = vlaneseq
    %v330 = vshrl.u32 %v329, 7
    %v331 = vsub.s32 0, %v330
    %v332 = vrot.slane %v327, %v331
    %v333 = vadd.bf16 %v279, %v325
    %v334 = vadd.bf16 %v280, %v332
    %v335 = vadd.bf16 %v281, %v325
    %v336 = vadd.bf16 %v282, %v332
    %v337 = vadd.bf16 %v283, %v325
    %v338 = vadd.bf16 %v284, %v332
    %v339 = vadd.bf16 %v285, %v325
    %v340 = vadd.bf16 %v286, %v332
    %v341 = vadd.bf16 %v287, %v325
    %v342 = vadd.bf16 %v288, %v332
    %v343 = vadd.bf16 %v289, %v325
    %v344 = vadd.bf16 %v290, %v332
    %v345 = vadd.bf16 %v291, %v325
    %v346 = vadd.bf16 %v292, %v332
    %v347 = vadd.bf16 %v293, %v325
    %v348 = vadd.bf16 %v294, %v332
    %v349 = vmax.bf16 %v333, 0
    %v350 = vmax.bf16 %v334, 0
    %v351 = vmax.bf16 %v335, 0
    %v352 = vmax.bf16 %v336, 0
    %v353 = vmax.bf16 %v337, 0
    %v354 = vmax.bf16 %v338, 0
    %v355 = vmax.bf16 %v339, 0
    %v356 = vmax.bf16 %v340, 0
    %v357 = vmax.bf16 %v341, 0
    %v358 = vmax.bf16 %v342, 0
    %v359 = vmax.bf16 %v343, 0
    %v360 = vmax.bf16 %v344, 0
    %v361 = vmax.bf16 %v345, 0
    %v362 = vmax.bf16 %v346, 0
    %v363 = vmax.bf16 %v347, 0
    %v364 = vmax.bf16 %v348, 0
    %v365 = vld [vmem:[%s3] sm:$0xff]
    %v366 = vld [vmem:[%s3 + $0x8] sm:$0xff]
    %v367 = vld [vmem:[%s3 + $0x10] sm:$0xff]
    %v368 = vld [vmem:[%s3 + $0x18] sm:$0xff]
    %v369 = vld [vmem:[%s3 + $0x20] sm:$0xff]
    %v370 = vld [vmem:[%s3 + $0x28] sm:$0xff]
    %v371 = vld [vmem:[%s3 + $0x30] sm:$0xff]
    %v372 = vld [vmem:[%s3 + $0x38] sm:$0xff]
    %v373 = vld [vmem:[%s3 + $0x40] sm:$0xff]
    %v374 = vld [vmem:[%s3 + $0x48] sm:$0xff]
    %v375 = vld [vmem:[%s3 + $0x50] sm:$0xff]
    %v376 = vld [vmem:[%s3 + $0x58] sm:$0xff]
    %v377 = vld [vmem:[%s3 + $0x60] sm:$0xff]
    %v378 = vld [vmem:[%s3 + $0x68] sm:$0xff]
    %v379 = vld [vmem:[%s3 + $0x70] sm:$0xff]
    %v380 = vld [vmem:[%s3 + $0x78] sm:$0xff]
    %v381 = vld [vmem:[%s3 + $0x80] sm:$0xff]
    %v382 = vld [vmem:[%s3 + $0x88] sm:$0xff]
    %v383 = vld [vmem:[%s3 + $0x90] sm:$0xff]
    %v384 = vld [vmem:[%s3 + $0x98] sm:$0xff]
    %v385 = vld [vmem:[%s3 + $0xa0] sm:$0xff]
    %v386 = vld [vmem:[%s3 + $0xa8] sm:$0xff]
    %v387 = vld [vmem:[%s3 + $0xb0] sm:$0xff]
    %v388 = vld [vmem:[%s3 + $0xb8] sm:$0xff]
    %v389 = vld [vmem:[%s3 + $0xc0] sm:$0xff]
    %v390 = vld [vmem:[%s3 + $0xc8] sm:$0xff]
    %v391 = vld [vmem:[%s3 + $0xd0] sm:$0xff]
    %v392 = vld [vmem:[%s3 + $0xd8] sm:$0xff]
    %v393 = vld [vmem:[%s3 + $0xe0] sm:$0xff]
    %v394 = vld [vmem:[%s3 + $0xe8] sm:$0xff]
    %v395 = vld [vmem:[%s3 + $0xf0] sm:$0xff]
    %v396 = vld [vmem:[%s3 + $0xf8] sm:$0xff]
    %v429 = vunpack.c.l.b16 %v365
    %v430 = vunpack.c.h.b16 %v365
    %v431 = vunpack.c.l.b16 %v366
    %v432 = vunpack.c.h.b16 %v366
    %v433 = vunpack.c.l.b16 %v367
    %v434 = vunpack.c.h.b16 %v367
    %v435 = vunpack.c.l.b16 %v368
    %v436 = vunpack.c.h.b16 %v368
    %v437 = vunpack.c.l.b16 %v369
    %v438 = vunpack.c.h.b16 %v369
    %v439 = vunpack.c.l.b16 %v370
    %v440 = vunpack.c.h.b16 %v370
    %v441 = vunpack.c.l.b16 %v371
    %v442 = vunpack.c.h.b16 %v371
    %v443 = vunpack.c.l.b16 %v372
    %v444 = vunpack.c.h.b16 %v372
    %v445 = vunpack.c.l.b16 %v373
    %v446 = vunpack.c.h.b16 %v373
    %v447 = vunpack.c.l.b16 %v374
    %v448 = vunpack.c.h.b16 %v374
    %v449 = vunpack.c.l.b16 %v375
    %v450 = vunpack.c.h.b16 %v375
    %v451 = vunpack.c.l.b16 %v376
    %v452 = vunpack.c.h.b16 %v376
    %v453 = vunpack.c.l.b16 %v377
    %v454 = vunpack.c.h.b16 %v377
    %v455 = vunpack.c.l.b16 %v378
    %v456 = vunpack.c.h.b16 %v378
    %v457 = vunpack.c.l.b16 %v379
    %v458 = vunpack.c.h.b16 %v379
    %v459 = vunpack.c.l.b16 %v380
    %v460 = vunpack.c.h.b16 %v380
    %v461 = vunpack.c.l.b16 %v381
    %v462 = vunpack.c.h.b16 %v381
    %v463 = vunpack.c.l.b16 %v382
    %v464 = vunpack.c.h.b16 %v382
    %v465 = vunpack.c.l.b16 %v383
    %v466 = vunpack.c.h.b16 %v383
    %v467 = vunpack.c.l.b16 %v384
    %v468 = vunpack.c.h.b16 %v384
    %v469 = vunpack.c.l.b16 %v385
    %v470 = vunpack.c.h.b16 %v385
    %v471 = vunpack.c.l.b16 %v386
    %v472 = vunpack.c.h.b16 %v386
    %v473 = vunpack.c.l.b16 %v387
    %v474 = vunpack.c.h.b16 %v387
    %v475 = vunpack.c.l.b16 %v388
    %v476 = vunpack.c.h.b16 %v388
    %v477 = vunpack.c.l.b16 %v389
    %v478 = vunpack.c.h.b16 %v389
    %v479 = vunpack.c.l.b16 %v390
    %v480 = vunpack.c.h.b16 %v390
    %v481 = vunpack.c.l.b16 %v391
    %v482 = vunpack.c.h.b16 %v391
    %v483 = vunpack.c.l.b16 %v392
    %v484 = vunpack.c.h.b16 %v392
    %v485 = vunpack.c.l.b16 %v393
    %v486 = vunpack.c.h.b16 %v393
    %v487 = vunpack.c.l.b16 %v394
    %v488 = vunpack.c.h.b16 %v394
    %v489 = vunpack.c.l.b16 %v395
    %v490 = vunpack.c.h.b16 %v395
    %v491 = vunpack.c.l.b16 %v396
    %v492 = vunpack.c.h.b16 %v396
    %v493 = vpack.c.b16 %v431, %v429
    %v494 = vpack.c.b16 %v432, %v430
    %v495 = vpack.c.b16 %v435, %v433
    %v496 = vpack.c.b16 %v436, %v434
    %v497 = vpack.c.b16 %v439, %v437
    %v498 = vpack.c.b16 %v440, %v438
    %v499 = vpack.c.b16 %v443, %v441
    %v500 = vpack.c.b16 %v444, %v442
    %v501 = vpack.c.b16 %v447, %v445
    %v502 = vpack.c.b16 %v448, %v446
    %v503 = vpack.c.b16 %v451, %v449
    %v504 = vpack.c.b16 %v452, %v450
    %v505 = vpack.c.b16 %v455, %v453
    %v506 = vpack.c.b16 %v456, %v454
    %v507 = vpack.c.b16 %v459, %v457
    %v508 = vpack.c.b16 %v460, %v458
    %v509 = vpack.c.b16 %v463, %v461
    %v510 = vpack.c.b16 %v464, %v462
    %v511 = vpack.c.b16 %v467, %v465
    %v512 = vpack.c.b16 %v468, %v466
    %v513 = vpack.c.b16 %v471, %v469
    %v514 = vpack.c.b16 %v472, %v470
    %v515 = vpack.c.b16 %v475, %v473
    %v516 = vpack.c.b16 %v476, %v474
    %v517 = vpack.c.b16 %v479, %v477
    %v518 = vpack.c.b16 %v480, %v478
    %v519 = vpack.c.b16 %v483, %v481
    %v520 = vpack.c.b16 %v484, %v482
    %v521 = vpack.c.b16 %v487, %v485
    %v522 = vpack.c.b16 %v488, %v486
    %v523 = vpack.c.b16 %v491, %v489
    %v524 = vpack.c.b16 %v492, %v490
    %557 = vmatprep.subr.bf16.mxu0 %v494
    %558 = vmatpush1.bf16.msra.mxu0 %v493
    %559 = vmatprep.subr.bf16.mxu0 %v496
    %560 = vmatpush1.bf16.msra.mxu0 %v495
    %561 = vmatprep.subr.bf16.mxu0 %v498
    %562 = vmatpush1.bf16.msra.mxu0 %v497
    %563 = vmatprep.subr.bf16.mxu0 %v500
    %564 = vmatpush1.bf16.msra.mxu0 %v499
    %565 = vmatprep.subr.bf16.mxu0 %v502
    %566 = vmatpush1.bf16.msra.mxu0 %v501
    %567 = vmatprep.subr.bf16.mxu0 %v504
    %568 = vmatpush1.bf16.msra.mxu0 %v503
    %569 = vmatprep.subr.bf16.mxu0 %v506
    %570 = vmatpush1.bf16.msra.mxu0 %v505
    %571 = vmatprep.subr.bf16.mxu0 %v508
    %572 = vmatpush1.bf16.msra.mxu0 %v507
    %573 = vmatprep.subr.bf16.mxu0 %v510
    %574 = vmatpush1.bf16.msra.mxu0 %v509
    %575 = vmatprep.subr.bf16.mxu0 %v512
    %576 = vmatpush1.bf16.msra.mxu0 %v511
    %577 = vmatprep.subr.bf16.mxu0 %v514
    %578 = vmatpush1.bf16.msra.mxu0 %v513
    %579 = vmatprep.subr.bf16.mxu0 %v516
    %580 = vmatpush1.bf16.msra.mxu0 %v515
    %581 = vmatprep.subr.bf16.mxu0 %v518
    %582 = vmatpush1.bf16.msra.mxu0 %v517
    %583 = vmatprep.subr.bf16.mxu0 %v520
    %584 = vmatpush1.bf16.msra.mxu0 %v519
    %585 = vmatprep.subr.bf16.mxu0 %v522
    %586 = vmatpush1.bf16.msra.mxu0 %v521
    %587 = vmatprep.subr.bf16.mxu0 %v524
    %588 = vmatpush1.bf16.msra.mxu0 %v523
    %589 = vmatprep.mubr.bf16.mxu0 %v350
    %590 = vmatmul.mubr.bf16.gmra.mrb[0].mxu0 %v349
    %v591 = vpop.f32.mrb[0].mxu0
    %v592 = vadd.f32 0.0, %v591
    %v593 = vpop.f32.mrb[0].mxu0
    %v594 = vadd.f32 0.0, %v593
    %v595 = vpop.f32.mrb[0].mxu0
    %v596 = vadd.f32 0.0, %v595
    %v597 = vpop.f32.mrb[0].mxu0
    %v598 = vadd.f32 0.0, %v597
    %599 = vmatprep.mubr.bf16.mxu0 %v352
    %600 = vmatmul.mubr.bf16.gmra.mrb[0].mxu0 %v351
    %v601 = vpop.f32.mrb[0].mxu0
    %v602 = vadd.f32 0.0, %v601
    %v603 = vpop.f32.mrb[0].mxu0
    %v604 = vadd.f32 0.0, %v603
    %v605 = vpop.f32.mrb[0].mxu0
    %v606 = vadd.f32 0.0, %v605
    %v607 = vpop.f32.mrb[0].mxu0
    %v608 = vadd.f32 0.0, %v607
    %609 = vmatprep.mubr.bf16.mxu0 %v354
    %610 = vmatmul.mubr.bf16.gmra.mrb[0].mxu0 %v353
    %v611 = vpop.f32.mrb[0].mxu0
    %v612 = vadd.f32 0.0, %v611
    %v613 = vpop.f32.mrb[0].mxu0
    %v614 = vadd.f32 0.0, %v613
    %v615 = vpop.f32.mrb[0].mxu0
    %v616 = vadd.f32 0.0, %v615
    %v617 = vpop.f32.mrb[0].mxu0
    %v618 = vadd.f32 0.0, %v617
    %619 = vmatprep.mubr.bf16.mxu0 %v356
    %620 = vmatmul.mubr.bf16.gmra.mrb[0].mxu0 %v355
    %v621 = vpop.f32.mrb[0].mxu0
    %v622 = vadd.f32 0.0, %v621
    %v623 = vpop.f32.mrb[0].mxu0
    %v624 = vadd.f32 0.0, %v623
    %v625 = vpop.f32.mrb[0].mxu0
    %v626 = vadd.f32 0.0, %v625
    %v627 = vpop.f32.mrb[0].mxu0
    %v628 = vadd.f32 0.0, %v627
    %629 = vmatprep.mubr.bf16.mxu0 %v358
    %630 = vmatmul.mubr.bf16.gmra.mrb[0].mxu0 %v357
    %v631 = vpop.f32.mrb[0].mxu0
    %v632 = vadd.f32 0.0, %v631
    %v633 = vpop.f32.mrb[0].mxu0
    %v634 = vadd.f32 0.0, %v633
    %v635 = vpop.f32.mrb[0].mxu0
    %v636 = vadd.f32 0.0, %v635
    %v637 = vpop.f32.mrb[0].mxu0
    %v638 = vadd.f32 0.0, %v637
    %639 = vmatprep.mubr.bf16.mxu0 %v360
    %640 = vmatmul.mubr.bf16.gmra.mrb[0].mxu0 %v359
    %v641 = vpop.f32.mrb[0].mxu0
    %v642 = vadd.f32 0.0, %v641
    %v643 = vpop.f32.mrb[0].mxu0
    %v644 = vadd.f32 0.0, %v643
    %v645 = vpop.f32.mrb[0].mxu0
    %v646 = vadd.f32 0.0, %v645
    %v647 = vpop.f32.mrb[0].mxu0
    %v648 = vadd.f32 0.0, %v647
    %649 = vmatprep.mubr.bf16.mxu0 %v362
    %650 = vmatmul.mubr.bf16.gmra.mrb[0].mxu0 %v361
    %v651 = vpop.f32.mrb[0].mxu0
    %v652 = vadd.f32 0.0, %v651
    %v653 = vpop.f32.mrb[0].mxu0
    %v654 = vadd.f32 0.0, %v653
    %v655 = vpop.f32.mrb[0].mxu0
    %v656 = vadd.f32 0.0, %v655
    %v657 = vpop.f32.mrb[0].mxu0
    %v658 = vadd.f32 0.0, %v657
    %659 = vmatprep.mubr.bf16.mxu0 %v364
    %660 = vmatmul.mubr.bf16.gmra.mrb[0].mxu0 %v363
    %v661 = vpop.f32.mrb[0].mxu0
    %v662 = vadd.f32 0.0, %v661
    %v663 = vpop.f32.mrb[0].mxu0
    %v664 = vadd.f32 0.0, %v663
    %v665 = vpop.f32.mrb[0].mxu0
    %v666 = vadd.f32 0.0, %v665
    %v667 = vpop.f32.mrb[0].mxu0
    %v668 = vadd.f32 0.0, %v667
    %669 = vdwg.mxu0
    %v670 = vpack.c.bf16 %v596, %v592
    %v671 = vpack.c.bf16 %v598, %v594
    %v672 = vpack.c.bf16 %v606, %v602
    %v673 = vpack.c.bf16 %v608, %v604
    %v674 = vpack.c.bf16 %v616, %v612
    %v675 = vpack.c.bf16 %v618, %v614
    %v676 = vpack.c.bf16 %v626, %v622
    %v677 = vpack.c.bf16 %v628, %v624
    %v678 = vpack.c.bf16 %v636, %v632
    %v679 = vpack.c.bf16 %v638, %v634
    %v680 = vpack.c.bf16 %v646, %v642
    %v681 = vpack.c.bf16 %v648, %v644
    %v682 = vpack.c.bf16 %v656, %v652
    %v683 = vpack.c.bf16 %v658, %v654
    %v684 = vpack.c.bf16 %v666, %v662
    %v685 = vpack.c.bf16 %v668, %v664
    %v686 = vld [vmem:[%s4] sm:$0x3]
    %v689 = vunpack.c.l.s4 1966171168
    %v690 = vunpack.c.0.s8 %v689
    %v691 = vlaneseq
    %v692 = vshrl.u32 %v691, 7
    %v693 = vsub.s32 %v690, %v692
    %v694 = vrot.slane %v686, %v693
    %v695 = vcombine.high %v694, %v694
    %v697 = vunpack.c.l.s4 1966171168
    %v698 = vunpack.c.0.s8 %v697
    %v699 = vlaneseq
    %v700 = vshrl.u32 %v699, 7
    %v701 = vsub.s32 %v698, %v700
    %v702 = vrot.slane %v694, %v701
    %v704 = vunpack.c.l.s4 1966171168
    %v705 = vunpack.c.0.s8 %v704
    %v706 = vlaneseq
    %v707 = vshrl.u32 %v706, 7
    %v708 = vsub.s32 %v705, %v707
    %v709 = vrot.slane %v695, %v708
    %v711 = vpack.i.b16 %v702, %v702
    %v713 = vlaneseq
    %v714 = vshrl.u32 %v713, 7
    %v715 = vsub.s32 0, %v714
    %v716 = vrot.slane %v711, %v715
    %v718 = vpack.i.b16 %v709, %v709
    %v720 = vlaneseq
    %v721 = vshrl.u32 %v720, 7
    %v722 = vsub.s32 0, %v721
    %v723 = vrot.slane %v718, %v722
    %v724 = vadd.bf16 %v670, %v716
    %v725 = vadd.bf16 %v671, %v723
    %v726 = vadd.bf16 %v672, %v716
    %v727 = vadd.bf16 %v673, %v723
    %v728 = vadd.bf16 %v674, %v716
    %v729 = vadd.bf16 %v675, %v723
    %v730 = vadd.bf16 %v676, %v716
    %v731 = vadd.bf16 %v677, %v723
    %v732 = vadd.bf16 %v678, %v716
    %v733 = vadd.bf16 %v679, %v723
    %v734 = vadd.bf16 %v680, %v716
    %v735 = vadd.bf16 %v681, %v723
    %v736 = vadd.bf16 %v682, %v716
    %v737 = vadd.bf16 %v683, %v723
    %v738 = vadd.bf16 %v684, %v716
    %v739 = vadd.bf16 %v685, %v723
    %v740 = vmax.bf16 %v724, 0
    %v741 = vmax.bf16 %v725, 0
    %v742 = vmax.bf16 %v726, 0
    %v743 = vmax.bf16 %v727, 0
    %v744 = vmax.bf16 %v728, 0
    %v745 = vmax.bf16 %v729, 0
    %v746 = vmax.bf16 %v730, 0
    %v747 = vmax.bf16 %v731, 0
    %v748 = vmax.bf16 %v732, 0
    %v749 = vmax.bf16 %v733, 0
    %v750 = vmax.bf16 %v734, 0
    %v751 = vmax.bf16 %v735, 0
    %v752 = vmax.bf16 %v736, 0
    %v753 = vmax.bf16 %v737, 0
    %v754 = vmax.bf16 %v738, 0
    %v755 = vmax.bf16 %v739, 0
    %v756 = vld [vmem:[%s5] sm:$0xff]
    %v757 = vld [vmem:[%s5 + $0x8] sm:$0xff]
    %v758 = vld [vmem:[%s5 + $0x10] sm:$0xff]
    %v759 = vld [vmem:[%s5 + $0x18] sm:$0xff]
    %v760 = vld [vmem:[%s5 + $0x20] sm:$0xff]
    %v761 = vld [vmem:[%s5 + $0x28] sm:$0xff]
    %v762 = vld [vmem:[%s5 + $0x30] sm:$0xff]
    %v763 = vld [vmem:[%s5 + $0x38] sm:$0xff]
    %v764 = vld [vmem:[%s5 + $0x40] sm:$0xff]
    %v765 = vld [vmem:[%s5 + $0x48] sm:$0xff]
    %v766 = vld [vmem:[%s5 + $0x50] sm:$0xff]
    %v767 = vld [vmem:[%s5 + $0x58] sm:$0xff]
    %v768 = vld [vmem:[%s5 + $0x60] sm:$0xff]
    %v769 = vld [vmem:[%s5 + $0x68] sm:$0xff]
    %v770 = vld [vmem:[%s5 + $0x70] sm:$0xff]
    %v771 = vld [vmem:[%s5 + $0x78] sm:$0xff]
    %v772 = vld [vmem:[%s5 + $0x80] sm:$0xff]
    %v773 = vld [vmem:[%s5 + $0x88] sm:$0xff]
    %v774 = vld [vmem:[%s5 + $0x90] sm:$0xff]
    %v775 = vld [vmem:[%s5 + $0x98] sm:$0xff]
    %v776 = vld [vmem:[%s5 + $0xa0] sm:$0xff]
    %v777 = vld [vmem:[%s5 + $0xa8] sm:$0xff]
    %v778 = vld [vmem:[%s5 + $0xb0] sm:$0xff]
    %v779 = vld [vmem:[%s5 + $0xb8] sm:$0xff]
    %v780 = vld [vmem:[%s6] sm:$0xff]
    %v781 = vld [vmem:[%s6 + $0x8] sm:$0xff]
    %v782 = vld [vmem:[%s6 + $0x10] sm:$0xff]
    %v783 = vld [vmem:[%s6 + $0x18] sm:$0xff]
    %v784 = vld [vmem:[%s6 + $0x20] sm:$0xff]
    %v785 = vld [vmem:[%s6 + $0x28] sm:$0xff]
    %v786 = vld [vmem:[%s6 + $0x30] sm:$0xff]
    %v787 = vld [vmem:[%s6 + $0x38] sm:$0xff]
    %v796 = vunpack.c.l.b16 %v780
    %v797 = vunpack.c.h.b16 %v780
    %v798 = vunpack.c.l.b16 %v781
    %v799 = vunpack.c.h.b16 %v781
    %v800 = vunpack.c.l.b16 %v782
    %v801 = vunpack.c.h.b16 %v782
    %v802 = vunpack.c.l.b16 %v783
    %v803 = vunpack.c.h.b16 %v783
    %v804 = vunpack.c.l.b16 %v784
    %v805 = vunpack.c.h.b16 %v784
    %v806 = vunpack.c.l.b16 %v785
    %v807 = vunpack.c.h.b16 %v785
    %v808 = vunpack.c.l.b16 %v786
    %v809 = vunpack.c.h.b16 %v786
    %v810 = vunpack.c.l.b16 %v787
    %v811 = vunpack.c.h.b16 %v787
    %v812 = vpack.c.b16 %v798, %v796
    %v813 = vpack.c.b16 %v799, %v797
    %v814 = vpack.c.b16 %v802, %v800
    %v815 = vpack.c.b16 %v803, %v801
    %v816 = vpack.c.b16 %v806, %v804
    %v817 = vpack.c.b16 %v807, %v805
    %v818 = vpack.c.b16 %v810, %v808
    %v819 = vpack.c.b16 %v811, %v809
    %828 = vmatprep.subr.bf16.mxu0 %v813
    %829 = vmatpush1.bf16.msra.mxu0 %v812
    %830 = vmatprep.subr.bf16.mxu0 %v815
    %831 = vmatpush1.bf16.msra.mxu0 %v814
    %832 = vmatprep.subr.bf16.mxu0 %v817
    %833 = vmatpush1.bf16.msra.mxu0 %v816
    %834 = vmatprep.subr.bf16.mxu0 %v819
    %835 = vmatpush1.bf16.msra.mxu0 %v818
    %836 = vmatprep.subr.bf16.mxu0 0
    %837 = vmatpush1.bf16.msra.mxu0 0
    %838 = vmatprep.subr.bf16.mxu0 0
    %839 = vmatpush1.bf16.msra.mxu0 0
    %840 = vmatprep.subr.bf16.mxu0 0
    %841 = vmatpush1.bf16.msra.mxu0 0
    %842 = vmatprep.subr.bf16.mxu0 0
    %843 = vmatpush1.bf16.msra.mxu0 0
    %844 = vmatprep.subr.bf16.mxu0 0
    %845 = vmatpush1.bf16.msra.mxu0 0
    %846 = vmatprep.subr.bf16.mxu0 0
    %847 = vmatpush1.bf16.msra.mxu0 0
    %848 = vmatprep.subr.bf16.mxu0 0
    %849 = vmatpush1.bf16.msra.mxu0 0
    %850 = vmatprep.subr.bf16.mxu0 0
    %851 = vmatpush1.bf16.msra.mxu0 0
    %852 = vmatprep.subr.bf16.mxu0 0
    %853 = vmatpush1.bf16.msra.mxu0 0
    %854 = vmatprep.subr.bf16.mxu0 0
    %855 = vmatpush1.bf16.msra.mxu0 0
    %856 = vmatprep.subr.bf16.mxu0 0
    %857 = vmatpush1.bf16.msra.mxu0 0
    %858 = vmatprep.subr.bf16.mxu0 0
    %859 = vmatpush1.bf16.msra.mxu0 0
    %860 = vmatprep.mubr.bf16.mxu0 0
    %861 = vmatmul.mubr.bf16.gmra.mrb[0].mxu0 %v143
    %v862 = vpop.f32.mrb[0].mxu0
    %v863 = vadd.f32 0.0, %v862
    %v864 = vpop.f32.mrb[0].mxu0
    %v865 = vadd.f32 0.0, %v864
    %v866 = vpop.f32.mrb[0].mxu0
    %v867 = vadd.f32 0.0, %v866
    %v868 = vpop.f32.mrb[0].mxu0
    %v869 = vadd.f32 0.0, %v868
    %870 = vmatprep.mubr.bf16.mxu0 0
    %871 = vmatmul.mubr.bf16.gmra.mrb[0].mxu0 %v146
    %v872 = vpop.f32.mrb[0].mxu0
    %v873 = vadd.f32 0.0, %v872
    %v874 = vpop.f32.mrb[0].mxu0
    %v875 = vadd.f32 0.0, %v874
    %v876 = vpop.f32.mrb[0].mxu0
    %v877 = vadd.f32 0.0, %v876
    %v878 = vpop.f32.mrb[0].mxu0
    %v879 = vadd.f32 0.0, %v878
    %880 = vmatprep.mubr.bf16.mxu0 0
    %881 = vmatmul.mubr.bf16.gmra.mrb[0].mxu0 %v149
    %v882 = vpop.f32.mrb[0].mxu0
    %v883 = vadd.f32 0.0, %v882
    %v884 = vpop.f32.mrb[0].mxu0
    %v885 = vadd.f32 0.0, %v884
    %v886 = vpop.f32.mrb[0].mxu0
    %v887 = vadd.f32 0.0, %v886
    %v888 = vpop.f32.mrb[0].mxu0
    %v889 = vadd.f32 0.0, %v888
    %890 = vmatprep.mubr.bf16.mxu0 0
    %891 = vmatmul.mubr.bf16.gmra.mrb[0].mxu0 %v152
    %v892 = vpop.f32.mrb[0].mxu0
    %v893 = vadd.f32 0.0, %v892
    %v894 = vpop.f32.mrb[0].mxu0
    %v895 = vadd.f32 0.0, %v894
    %v896 = vpop.f32.mrb[0].mxu0
    %v897 = vadd.f32 0.0, %v896
    %v898 = vpop.f32.mrb[0].mxu0
    %v899 = vadd.f32 0.0, %v898
    %900 = vmatprep.mubr.bf16.mxu0 0
    %901 = vmatmul.mubr.bf16.gmra.mrb[0].mxu0 %v155
    %v902 = vpop.f32.mrb[0].mxu0
    %v903 = vadd.f32 0.0, %v902
    %v904 = vpop.f32.mrb[0].mxu0
    %v905 = vadd.f32 0.0, %v904
    %v906 = vpop.f32.mrb[0].mxu0
    %v907 = vadd.f32 0.0, %v906
    %v908 = vpop.f32.mrb[0].mxu0
    %v909 = vadd.f32 0.0, %v908
    %910 = vmatprep.mubr.bf16.mxu0 0
    %911 = vmatmul.mubr.bf16.gmra.mrb[0].mxu0 %v158
    %v912 = vpop.f32.mrb[0].mxu0
    %v913 = vadd.f32 0.0, %v912
    %v914 = vpop.f32.mrb[0].mxu0
    %v915 = vadd.f32 0.0, %v914
    %v916 = vpop.f32.mrb[0].mxu0
    %v917 = vadd.f32 0.0, %v916
    %v918 = vpop.f32.mrb[0].mxu0
    %v919 = vadd.f32 0.0, %v918
    %920 = vmatprep.mubr.bf16.mxu0 0
    %921 = vmatmul.mubr.bf16.gmra.mrb[0].mxu0 %v161
    %v922 = vpop.f32.mrb[0].mxu0
    %v923 = vadd.f32 0.0, %v922
    %v924 = vpop.f32.mrb[0].mxu0
    %v925 = vadd.f32 0.0, %v924
    %v926 = vpop.f32.mrb[0].mxu0
    %v927 = vadd.f32 0.0, %v926
    %v928 = vpop.f32.mrb[0].mxu0
    %v929 = vadd.f32 0.0, %v928
    %930 = vmatprep.mubr.bf16.mxu0 0
    %931 = vmatmul.mubr.bf16.gmra.mrb[0].mxu0 %v164
    %v932 = vpop.f32.mrb[0].mxu0
    %v933 = vadd.f32 0.0, %v932
    %v934 = vpop.f32.mrb[0].mxu0
    %v935 = vadd.f32 0.0, %v934
    %v936 = vpop.f32.mrb[0].mxu0
    %v937 = vadd.f32 0.0, %v936
    %v938 = vpop.f32.mrb[0].mxu0
    %v939 = vadd.f32 0.0, %v938
    %940 = vdwg.mxu0
    %v965 = vunpack.c.l.b16 %v756
    %v966 = vunpack.c.h.b16 %v756
    %v967 = vunpack.c.l.b16 %v757
    %v968 = vunpack.c.h.b16 %v757
    %v969 = vunpack.c.l.b16 %v758
    %v970 = vunpack.c.h.b16 %v758
    %v971 = vunpack.c.l.b16 %v759
    %v972 = vunpack.c.h.b16 %v759
    %v973 = vunpack.c.l.b16 %v760
    %v974 = vunpack.c.h.b16 %v760
    %v975 = vunpack.c.l.b16 %v761
    %v976 = vunpack.c.h.b16 %v761
    %v977 = vunpack.c.l.b16 %v762
    %v978 = vunpack.c.h.b16 %v762
    %v979 = vunpack.c.l.b16 %v763
    %v980 = vunpack.c.h.b16 %v763
    %v981 = vunpack.c.l.b16 %v764
    %v982 = vunpack.c.h.b16 %v764
    %v983 = vunpack.c.l.b16 %v765
    %v984 = vunpack.c.h.b16 %v765
    %v985 = vunpack.c.l.b16 %v766
    %v986 = vunpack.c.h.b16 %v766
    %v987 = vunpack.c.l.b16 %v767
    %v988 = vunpack.c.h.b16 %v767
    %v989 = vunpack.c.l.b16 %v768
    %v990 = vunpack.c.h.b16 %v768
    %v991 = vunpack.c.l.b16 %v769
    %v992 = vunpack.c.h.b16 %v769
    %v993 = vunpack.c.l.b16 %v770
    %v994 = vunpack.c.h.b16 %v770
    %v995 = vunpack.c.l.b16 %v771
    %v996 = vunpack.c.h.b16 %v771
    %v997 = vunpack.c.l.b16 %v772
    %v998 = vunpack.c.h.b16 %v772
    %v999 = vunpack.c.l.b16 %v773
    %v1000 = vunpack.c.h.b16 %v773
    %v1001 = vunpack.c.l.b16 %v774
    %v1002 = vunpack.c.h.b16 %v774
    %v1003 = vunpack.c.l.b16 %v775
    %v1004 = vunpack.c.h.b16 %v775
    %v1005 = vunpack.c.l.b16 %v776
    %v1006 = vunpack.c.h.b16 %v776
    %v1007 = vunpack.c.l.b16 %v777
    %v1008 = vunpack.c.h.b16 %v777
    %v1009 = vunpack.c.l.b16 %v778
    %v1010 = vunpack.c.h.b16 %v778
    %v1011 = vunpack.c.l.b16 %v779
    %v1012 = vunpack.c.h.b16 %v779
    %v1013 = vpack.c.b16 %v967, %v965
    %v1014 = vpack.c.b16 %v968, %v966
    %v1015 = vpack.c.b16 %v971, %v969
    %v1016 = vpack.c.b16 %v972, %v970
    %v1017 = vpack.c.b16 %v975, %v973
    %v1018 = vpack.c.b16 %v976, %v974
    %v1019 = vpack.c.b16 %v979, %v977
    %v1020 = vpack.c.b16 %v980, %v978
    %v1021 = vpack.c.b16 %v983, %v981
    %v1022 = vpack.c.b16 %v984, %v982
    %v1023 = vpack.c.b16 %v987, %v985
    %v1024 = vpack.c.b16 %v988, %v986
    %v1025 = vpack.c.b16 %v991, %v989
    %v1026 = vpack.c.b16 %v992, %v990
    %v1027 = vpack.c.b16 %v995, %v993
    %v1028 = vpack.c.b16 %v996, %v994
    %v1029 = vpack.c.b16 %v999, %v997
    %v1030 = vpack.c.b16 %v1000, %v998
    %v1031 = vpack.c.b16 %v1003, %v1001
    %v1032 = vpack.c.b16 %v1004, %v1002
    %v1033 = vpack.c.b16 %v1007, %v1005
    %v1034 = vpack.c.b16 %v1008, %v1006
    %v1035 = vpack.c.b16 %v1011, %v1009
    %v1036 = vpack.c.b16 %v1012, %v1010
    %v1062 = vsel %vm141, %v741, 0
    %v1065 = vsel %vm141, %v743, 0
    %v1068 = vsel %vm141, %v745, 0
    %v1071 = vsel %vm141, %v747, 0
    %v1074 = vsel %vm141, %v749, 0
    %v1077 = vsel %vm141, %v751, 0
    %v1080 = vsel %vm141, %v753, 0
    %v1083 = vsel %vm141, %v755, 0
    %1085 = vmatprep.subr.bf16.mxu0 %v1014
    %1086 = vmatpush1.bf16.msra.mxu0 %v1013
    %1087 = vmatprep.subr.bf16.mxu0 %v1016
    %1088 = vmatpush1.bf16.msra.mxu0 %v1015
    %1089 = vmatprep.subr.bf16.mxu0 %v1018
    %1090 = vmatpush1.bf16.msra.mxu0 %v1017
    %1091 = vmatprep.subr.bf16.mxu0 %v1020
    %1092 = vmatpush1.bf16.msra.mxu0 %v1019
    %1093 = vmatprep.subr.bf16.mxu0 %v1022
    %1094 = vmatpush1.bf16.msra.mxu0 %v1021
    %1095 = vmatprep.subr.bf16.mxu0 %v1024
    %1096 = vmatpush1.bf16.msra.mxu0 %v1023
    %1097 = vmatprep.subr.bf16.mxu0 %v1026
    %1098 = vmatpush1.bf16.msra.mxu0 %v1025
    %1099 = vmatprep.subr.bf16.mxu0 %v1028
    %1100 = vmatpush1.bf16.msra.mxu0 %v1027
    %1101 = vmatprep.subr.bf16.mxu0 %v1030
    %1102 = vmatpush1.bf16.msra.mxu0 %v1029
    %1103 = vmatprep.subr.bf16.mxu0 %v1032
    %1104 = vmatpush1.bf16.msra.mxu0 %v1031
    %1105 = vmatprep.subr.bf16.mxu0 %v1034
    %1106 = vmatpush1.bf16.msra.mxu0 %v1033
    %1107 = vmatprep.subr.bf16.mxu0 %v1036
    %1108 = vmatpush1.bf16.msra.mxu0 %v1035
    %1109 = vmatprep.subr.bf16.mxu0 0
    %1110 = vmatpush1.bf16.msra.mxu0 0
    %1111 = vmatprep.subr.bf16.mxu0 0
    %1112 = vmatpush1.bf16.msra.mxu0 0
    %1113 = vmatprep.subr.bf16.mxu0 0
    %1114 = vmatpush1.bf16.msra.mxu0 0
    %1115 = vmatprep.subr.bf16.mxu0 0
    %1116 = vmatpush1.bf16.msra.mxu0 0
    %1117 = vmatprep.mubr.bf16.mxu0 %v1062
    %1118 = vmatmul.mubr.bf16.gmra.mrb[0].mxu0 %v740
    %v1119 = vpop.f32.mrb[0].mxu0
    %v1120 = vadd.f32 %v863, %v1119
    %v1121 = vpop.f32.mrb[0].mxu0
    %v1122 = vadd.f32 %v865, %v1121
    %v1123 = vpop.f32.mrb[0].mxu0
    %v1124 = vadd.f32 %v867, %v1123
    %v1125 = vpop.f32.mrb[0].mxu0
    %v1126 = vadd.f32 %v869, %v1125
    %1127 = vmatprep.mubr.bf16.mxu0 %v1065
    %1128 = vmatmul.mubr.bf16.gmra.mrb[0].mxu0 %v742
    %v1129 = vpop.f32.mrb[0].mxu0
    %v1130 = vadd.f32 %v873, %v1129
    %v1131 = vpop.f32.mrb[0].mxu0
    %v1132 = vadd.f32 %v875, %v1131
    %v1133 = vpop.f32.mrb[0].mxu0
    %v1134 = vadd.f32 %v877, %v1133
    %v1135 = vpop.f32.mrb[0].mxu0
    %v1136 = vadd.f32 %v879, %v1135
    %1137 = vmatprep.mubr.bf16.mxu0 %v1068
    %1138 = vmatmul.mubr.bf16.gmra.mrb[0].mxu0 %v744
    %v1139 = vpop.f32.mrb[0].mxu0
    %v1140 = vadd.f32 %v883, %v1139
    %v1141 = vpop.f32.mrb[0].mxu0
    %v1142 = vadd.f32 %v885, %v1141
    %v1143 = vpop.f32.mrb[0].mxu0
    %v1144 = vadd.f32 %v887, %v1143
    %v1145 = vpop.f32.mrb[0].mxu0
    %v1146 = vadd.f32 %v889, %v1145
    %1147 = vmatprep.mubr.bf16.mxu0 %v1071
    %1148 = vmatmul.mubr.bf16.gmra.mrb[0].mxu0 %v746
    %v1149 = vpop.f32.mrb[0].mxu0
    %v1150 = vadd.f32 %v893, %v1149
    %v1151 = vpop.f32.mrb[0].mxu0
    %v1152 = vadd.f32 %v895, %v1151
    %v1153 = vpop.f32.mrb[0].mxu0
    %v1154 = vadd.f32 %v897, %v1153
    %v1155 = vpop.f32.mrb[0].mxu0
    %v1156 = vadd.f32 %v899, %v1155
    %1157 = vmatprep.mubr.bf16.mxu0 %v1074
    %1158 = vmatmul.mubr.bf16.gmra.mrb[0].mxu0 %v748
    %v1159 = vpop.f32.mrb[0].mxu0
    %v1160 = vadd.f32 %v903, %v1159
    %v1161 = vpop.f32.mrb[0].mxu0
    %v1162 = vadd.f32 %v905, %v1161
    %v1163 = vpop.f32.mrb[0].mxu0
    %v1164 = vadd.f32 %v907, %v1163
    %v1165 = vpop.f32.mrb[0].mxu0
    %v1166 = vadd.f32 %v909, %v1165
    %1167 = vmatprep.mubr.bf16.mxu0 %v1077
    %1168 = vmatmul.mubr.bf16.gmra.mrb[0].mxu0 %v750
    %v1169 = vpop.f32.mrb[0].mxu0
    %v1170 = vadd.f32 %v913, %v1169
    %v1171 = vpop.f32.mrb[0].mxu0
    %v1172 = vadd.f32 %v915, %v1171
    %v1173 = vpop.f32.mrb[0].mxu0
    %v1174 = vadd.f32 %v917, %v1173
    %v1175 = vpop.f32.mrb[0].mxu0
    %v1176 = vadd.f32 %v919, %v1175
    %1177 = vmatprep.mubr.bf16.mxu0 %v1080
    %1178 = vmatmul.mubr.bf16.gmra.mrb[0].mxu0 %v752
    %v1179 = vpop.f32.mrb[0].mxu0
    %v1180 = vadd.f32 %v923, %v1179
    %v1181 = vpop.f32.mrb[0].mxu0
    %v1182 = vadd.f32 %v925, %v1181
    %v1183 = vpop.f32.mrb[0].mxu0
    %v1184 = vadd.f32 %v927, %v1183
    %v1185 = vpop.f32.mrb[0].mxu0
    %v1186 = vadd.f32 %v929, %v1185
    %1187 = vmatprep.mubr.bf16.mxu0 %v1083
    %1188 = vmatmul.mubr.bf16.gmra.mrb[0].mxu0 %v754
    %v1189 = vpop.f32.mrb[0].mxu0
    %v1190 = vadd.f32 %v933, %v1189
    %v1191 = vpop.f32.mrb[0].mxu0
    %v1192 = vadd.f32 %v935, %v1191
    %v1193 = vpop.f32.mrb[0].mxu0
    %v1194 = vadd.f32 %v937, %v1193
    %v1195 = vpop.f32.mrb[0].mxu0
    %v1196 = vadd.f32 %v939, %v1195
    %1197 = vdwg.mxu0
    %v1198 = vpack.c.bf16 %v1124, %v1120
    %v1199 = vpack.c.bf16 %v1126, %v1122
    %v1200 = vpack.c.bf16 %v1134, %v1130
    %v1201 = vpack.c.bf16 %v1136, %v1132
    %v1202 = vpack.c.bf16 %v1144, %v1140
    %v1203 = vpack.c.bf16 %v1146, %v1142
    %v1204 = vpack.c.bf16 %v1154, %v1150
    %v1205 = vpack.c.bf16 %v1156, %v1152
    %v1206 = vpack.c.bf16 %v1164, %v1160
    %v1207 = vpack.c.bf16 %v1166, %v1162
    %v1208 = vpack.c.bf16 %v1174, %v1170
    %v1209 = vpack.c.bf16 %v1176, %v1172
    %v1210 = vpack.c.bf16 %v1184, %v1180
    %v1211 = vpack.c.bf16 %v1186, %v1182
    %v1212 = vpack.c.bf16 %v1194, %v1190
    %v1213 = vpack.c.bf16 %v1196, %v1192
    %v1214 = vld [vmem:[%s7] sm:$0x3]
    %v1217 = vunpack.c.l.s4 1966171168
    %v1218 = vunpack.c.0.s8 %v1217
    %v1219 = vlaneseq
    %v1220 = vshrl.u32 %v1219, 7
    %v1221 = vsub.s32 %v1218, %v1220
    %v1222 = vrot.slane %v1214, %v1221
    %v1223 = vcombine.high %v1222, %v1222
    %v1225 = vunpack.c.l.s4 1966171168
    %v1226 = vunpack.c.0.s8 %v1225
    %v1227 = vlaneseq
    %v1228 = vshrl.u32 %v1227, 7
    %v1229 = vsub.s32 %v1226, %v1228
    %v1230 = vrot.slane %v1222, %v1229
    %v1232 = vunpack.c.l.s4 1966171168
    %v1233 = vunpack.c.0.s8 %v1232
    %v1234 = vlaneseq
    %v1235 = vshrl.u32 %v1234, 7
    %v1236 = vsub.s32 %v1233, %v1235
    %v1237 = vrot.slane %v1223, %v1236
    %v1239 = vpack.i.b16 %v1230, %v1230
    %v1241 = vlaneseq
    %v1242 = vshrl.u32 %v1241, 7
    %v1243 = vsub.s32 0, %v1242
    %v1244 = vrot.slane %v1239, %v1243
    %v1246 = vpack.i.b16 %v1237, %v1237
    %v1248 = vlaneseq
    %v1249 = vshrl.u32 %v1248, 7
    %v1250 = vsub.s32 0, %v1249
    %v1251 = vrot.slane %v1246, %v1250
    %v1252 = vadd.bf16 %v1198, %v1244
    %v1253 = vadd.bf16 %v1199, %v1251
    %v1254 = vadd.bf16 %v1200, %v1244
    %v1255 = vadd.bf16 %v1201, %v1251
    %v1256 = vadd.bf16 %v1202, %v1244
    %v1257 = vadd.bf16 %v1203, %v1251
    %v1258 = vadd.bf16 %v1204, %v1244
    %v1259 = vadd.bf16 %v1205, %v1251
    %v1260 = vadd.bf16 %v1206, %v1244
    %v1261 = vadd.bf16 %v1207, %v1251
    %v1262 = vadd.bf16 %v1208, %v1244
    %v1263 = vadd.bf16 %v1209, %v1251
    %v1264 = vadd.bf16 %v1210, %v1244
    %v1265 = vadd.bf16 %v1211, %v1251
    %v1266 = vadd.bf16 %v1212, %v1244
    %v1267 = vadd.bf16 %v1213, %v1251
    %v1268 = vmax.bf16 %v1252, 0
    %v1269 = vmax.bf16 %v1253, 0
    %v1270 = vmax.bf16 %v1254, 0
    %v1271 = vmax.bf16 %v1255, 0
    %v1272 = vmax.bf16 %v1256, 0
    %v1273 = vmax.bf16 %v1257, 0
    %v1274 = vmax.bf16 %v1258, 0
    %v1275 = vmax.bf16 %v1259, 0
    %v1276 = vmax.bf16 %v1260, 0
    %v1277 = vmax.bf16 %v1261, 0
    %v1278 = vmax.bf16 %v1262, 0
    %v1279 = vmax.bf16 %v1263, 0
    %v1280 = vmax.bf16 %v1264, 0
    %v1281 = vmax.bf16 %v1265, 0
    %v1282 = vmax.bf16 %v1266, 0
    %v1283 = vmax.bf16 %v1267, 0
    %v1284 = vld [vmem:[%s8] sm:$0xf]
    %v1285 = vld [vmem:[%s8 + $0x4] sm:$0xf]
    %v1286 = vld [vmem:[%s8 + $0x8] sm:$0xf]
    %v1287 = vld [vmem:[%s8 + $0xc] sm:$0xf]
    %v1288 = vld [vmem:[%s8 + $0x10] sm:$0xf]
    %v1289 = vld [vmem:[%s8 + $0x14] sm:$0xf]
    %v1290 = vld [vmem:[%s8 + $0x18] sm:$0xf]
    %v1291 = vld [vmem:[%s8 + $0x1c] sm:$0xf]
    %v1292 = vld [vmem:[%s8 + $0x20] sm:$0xf]
    %v1293 = vld [vmem:[%s8 + $0x24] sm:$0xf]
    %v1294 = vld [vmem:[%s8 + $0x28] sm:$0xf]
    %v1295 = vld [vmem:[%s8 + $0x2c] sm:$0xf]
    %v1296 = vld [vmem:[%s8 + $0x30] sm:$0xf]
    %v1297 = vld [vmem:[%s8 + $0x34] sm:$0xf]
    %v1298 = vld [vmem:[%s8 + $0x38] sm:$0xf]
    %v1299 = vld [vmem:[%s8 + $0x3c] sm:$0xf]
    %v1300 = vld [vmem:[%s8 + $0x40] sm:$0xf]
    %v1301 = vld [vmem:[%s8 + $0x44] sm:$0xf]
    %v1302 = vld [vmem:[%s8 + $0x48] sm:$0xf]
    %v1303 = vld [vmem:[%s8 + $0x4c] sm:$0xf]
    %v1304 = vld [vmem:[%s8 + $0x50] sm:$0xf]
    %v1305 = vld [vmem:[%s8 + $0x54] sm:$0xf]
    %v1306 = vld [vmem:[%s8 + $0x58] sm:$0xf]
    %v1307 = vld [vmem:[%s8 + $0x5c] sm:$0xf]
    %v1308 = vld [vmem:[%s8 + $0x60] sm:$0xf]
    %v1309 = vld [vmem:[%s8 + $0x64] sm:$0xf]
    %v1310 = vld [vmem:[%s8 + $0x68] sm:$0xf]
    %v1311 = vld [vmem:[%s8 + $0x6c] sm:$0xf]
    %v1312 = vld [vmem:[%s8 + $0x70] sm:$0xf]
    %v1313 = vld [vmem:[%s8 + $0x74] sm:$0xf]
    %v1314 = vld [vmem:[%s8 + $0x78] sm:$0xf]
    %v1315 = vld [vmem:[%s8 + $0x7c] sm:$0xf]
    %v1348 = vunpack.c.l.b16 %v1284
    %v1349 = vunpack.c.l.b16 %v1285
    %v1350 = vunpack.c.l.b16 %v1286
    %v1351 = vunpack.c.l.b16 %v1287
    %v1352 = vunpack.c.l.b16 %v1288
    %v1353 = vunpack.c.l.b16 %v1289
    %v1354 = vunpack.c.l.b16 %v1290
    %v1355 = vunpack.c.l.b16 %v1291
    %v1356 = vunpack.c.l.b16 %v1292
    %v1357 = vunpack.c.l.b16 %v1293
    %v1358 = vunpack.c.l.b16 %v1294
    %v1359 = vunpack.c.l.b16 %v1295
    %v1360 = vunpack.c.l.b16 %v1296
    %v1361 = vunpack.c.l.b16 %v1297
    %v1362 = vunpack.c.l.b16 %v1298
    %v1363 = vunpack.c.l.b16 %v1299
    %v1364 = vunpack.c.l.b16 %v1300
    %v1365 = vunpack.c.l.b16 %v1301
    %v1366 = vunpack.c.l.b16 %v1302
    %v1367 = vunpack.c.l.b16 %v1303
    %v1368 = vunpack.c.l.b16 %v1304
    %v1369 = vunpack.c.l.b16 %v1305
    %v1370 = vunpack.c.l.b16 %v1306
    %v1371 = vunpack.c.l.b16 %v1307
    %v1372 = vunpack.c.l.b16 %v1308
    %v1373 = vunpack.c.l.b16 %v1309
    %v1374 = vunpack.c.l.b16 %v1310
    %v1375 = vunpack.c.l.b16 %v1311
    %v1376 = vunpack.c.l.b16 %v1312
    %v1377 = vunpack.c.l.b16 %v1313
    %v1378 = vunpack.c.l.b16 %v1314
    %v1379 = vunpack.c.l.b16 %v1315
    %v1380 = vpack.c.b16 %v1349, %v1348
    %v1381 = vpack.c.b16 %v1351, %v1350
    %v1382 = vpack.c.b16 %v1353, %v1352
    %v1383 = vpack.c.b16 %v1355, %v1354
    %v1384 = vpack.c.b16 %v1357, %v1356
    %v1385 = vpack.c.b16 %v1359, %v1358
    %v1386 = vpack.c.b16 %v1361, %v1360
    %v1387 = vpack.c.b16 %v1363, %v1362
    %v1388 = vpack.c.b16 %v1365, %v1364
    %v1389 = vpack.c.b16 %v1367, %v1366
    %v1390 = vpack.c.b16 %v1369, %v1368
    %v1391 = vpack.c.b16 %v1371, %v1370
    %v1392 = vpack.c.b16 %v1373, %v1372
    %v1393 = vpack.c.b16 %v1375, %v1374
    %v1394 = vpack.c.b16 %v1377, %v1376
    %v1395 = vpack.c.b16 %v1379, %v1378
    %1412 = vmatprep.subr.bf16.mxu0 0
    %1413 = vmatpush1.bf16.msra.mxu0 %v1380
    %1414 = vmatprep.subr.bf16.mxu0 0
    %1415 = vmatpush1.bf16.msra.mxu0 %v1381
    %1416 = vmatprep.subr.bf16.mxu0 0
    %1417 = vmatpush1.bf16.msra.mxu0 %v1382
    %1418 = vmatprep.subr.bf16.mxu0 0
    %1419 = vmatpush1.bf16.msra.mxu0 %v1383
    %1420 = vmatprep.subr.bf16.mxu0 0
    %1421 = vmatpush1.bf16.msra.mxu0 %v1384
    %1422 = vmatprep.subr.bf16.mxu0 0
    %1423 = vmatpush1.bf16.msra.mxu0 %v1385
    %1424 = vmatprep.subr.bf16.mxu0 0
    %1425 = vmatpush1.bf16.msra.mxu0 %v1386
    %1426 = vmatprep.subr.bf16.mxu0 0
    %1427 = vmatpush1.bf16.msra.mxu0 %v1387
    %1428 = vmatprep.subr.bf16.mxu0 0
    %1429 = vmatpush1.bf16.msra.mxu0 %v1388
    %1430 = vmatprep.subr.bf16.mxu0 0
    %1431 = vmatpush1.bf16.msra.mxu0 %v1389
    %1432 = vmatprep.subr.bf16.mxu0 0
    %1433 = vmatpush1.bf16.msra.mxu0 %v1390
    %1434 = vmatprep.subr.bf16.mxu0 0
    %1435 = vmatpush1.bf16.msra.mxu0 %v1391
    %1436 = vmatprep.subr.bf16.mxu0 0
    %1437 = vmatpush1.bf16.msra.mxu0 %v1392
    %1438 = vmatprep.subr.bf16.mxu0 0
    %1439 = vmatpush1.bf16.msra.mxu0 %v1393
    %1440 = vmatprep.subr.bf16.mxu0 0
    %1441 = vmatpush1.bf16.msra.mxu0 %v1394
    %1442 = vmatprep.subr.bf16.mxu0 0
    %1443 = vmatpush1.bf16.msra.mxu0 %v1395
    %1444 = vmatprep.mubr.bf16.mxu0 %v1269
    %1445 = vmatmul.mubr.bf16.gmra.mrb[0].mxu0 %v1268
    %v1446 = vpop.f32.mrb[0].mxu0
    %v1447 = vadd.f32 0.0, %v1446
    %v1448 = vpop.f32.mrb[0].mxu0
    %v1449 = vpop.f32.mrb[0].mxu0
    %v1450 = vadd.f32 0.0, %v1449
    %v1451 = vpop.f32.mrb[0].mxu0
    %1452 = vmatprep.mubr.bf16.mxu0 %v1271
    %1453 = vmatmul.mubr.bf16.gmra.mrb[0].mxu0 %v1270
    %v1454 = vpop.f32.mrb[0].mxu0
    %v1455 = vadd.f32 0.0, %v1454
    %v1456 = vpop.f32.mrb[0].mxu0
    %v1457 = vpop.f32.mrb[0].mxu0
    %v1458 = vadd.f32 0.0, %v1457
    %v1459 = vpop.f32.mrb[0].mxu0
    %1460 = vmatprep.mubr.bf16.mxu0 %v1273
    %1461 = vmatmul.mubr.bf16.gmra.mrb[0].mxu0 %v1272
    %v1462 = vpop.f32.mrb[0].mxu0
    %v1463 = vadd.f32 0.0, %v1462
    %v1464 = vpop.f32.mrb[0].mxu0
    %v1465 = vpop.f32.mrb[0].mxu0
    %v1466 = vadd.f32 0.0, %v1465
    %v1467 = vpop.f32.mrb[0].mxu0
    %1468 = vmatprep.mubr.bf16.mxu0 %v1275
    %1469 = vmatmul.mubr.bf16.gmra.mrb[0].mxu0 %v1274
    %v1470 = vpop.f32.mrb[0].mxu0
    %v1471 = vadd.f32 0.0, %v1470
    %v1472 = vpop.f32.mrb[0].mxu0
    %v1473 = vpop.f32.mrb[0].mxu0
    %v1474 = vadd.f32 0.0, %v1473
    %v1475 = vpop.f32.mrb[0].mxu0
    %1476 = vmatprep.mubr.bf16.mxu0 %v1277
    %1477 = vmatmul.mubr.bf16.gmra.mrb[0].mxu0 %v1276
    %v1478 = vpop.f32.mrb[0].mxu0
    %v1479 = vadd.f32 0.0, %v1478
    %v1480 = vpop.f32.mrb[0].mxu0
    %v1481 = vpop.f32.mrb[0].mxu0
    %v1482 = vadd.f32 0.0, %v1481
    %v1483 = vpop.f32.mrb[0].mxu0
    %1484 = vmatprep.mubr.bf16.mxu0 %v1279
    %1485 = vmatmul.mubr.bf16.gmra.mrb[0].mxu0 %v1278
    %v1486 = vpop.f32.mrb[0].mxu0
    %v1487 = vadd.f32 0.0, %v1486
    %v1488 = vpop.f32.mrb[0].mxu0
    %v1489 = vpop.f32.mrb[0].mxu0
    %v1490 = vadd.f32 0.0, %v1489
    %v1491 = vpop.f32.mrb[0].mxu0
    %1492 = vmatprep.mubr.bf16.mxu0 %v1281
    %1493 = vmatmul.mubr.bf16.gmra.mrb[0].mxu0 %v1280
    %v1494 = vpop.f32.mrb[0].mxu0
    %v1495 = vadd.f32 0.0, %v1494
    %v1496 = vpop.f32.mrb[0].mxu0
    %v1497 = vpop.f32.mrb[0].mxu0
    %v1498 = vadd.f32 0.0, %v1497
    %v1499 = vpop.f32.mrb[0].mxu0
    %1500 = vmatprep.mubr.bf16.mxu0 %v1283
    %1501 = vmatmul.mubr.bf16.gmra.mrb[0].mxu0 %v1282
    %v1502 = vpop.f32.mrb[0].mxu0
    %v1503 = vadd.f32 0.0, %v1502
    %v1504 = vpop.f32.mrb[0].mxu0
    %v1505 = vpop.f32.mrb[0].mxu0
    %v1506 = vadd.f32 0.0, %v1505
    %v1507 = vpop.f32.mrb[0].mxu0
    %1508 = vdwg.mxu0
    %v1509 = vpack.c.bf16 %v1450, %v1447
    %v1510 = vpack.c.bf16 %v1458, %v1455
    %v1511 = vpack.c.bf16 %v1466, %v1463
    %v1512 = vpack.c.bf16 %v1474, %v1471
    %v1513 = vpack.c.bf16 %v1482, %v1479
    %v1514 = vpack.c.bf16 %v1490, %v1487
    %v1515 = vpack.c.bf16 %v1498, %v1495
    %v1516 = vpack.c.bf16 %v1506, %v1503
    %v1517 = vld [vmem:[%s9] sm:$0x1]
    %v1519 = vpack.i.b16 %v1517, %v1517
    %v1521 = vlaneseq
    %v1522 = vshrl.u32 %v1521, 7
    %v1523 = vsub.s32 0, %v1522
    %v1524 = vrot.slane %v1519, %v1523
    %v1525 = vadd.bf16 %v1509, %v1524
    %v1526 = vadd.bf16 %v1510, %v1524
    %v1527 = vadd.bf16 %v1511, %v1524
    %v1528 = vadd.bf16 %v1512, %v1524
    %v1529 = vadd.bf16 %v1513, %v1524
    %v1530 = vadd.bf16 %v1514, %v1524
    %v1531 = vadd.bf16 %v1515, %v1524
    %v1532 = vadd.bf16 %v1516, %v1524
    %1533 = vxpose.xlu0.c.b16.start [1/8] %v1525, 128
    %1534 = vxpose.xlu0.c.b16.cont [2/8] %v1526, 128
    %1535 = vxpose.xlu0.c.b16.cont [3/8] %v1527, 128
    %1536 = vxpose.xlu0.c.b16.cont [4/8] %v1528, 128
    %1537 = vxpose.xlu0.c.b16.cont [5/8] %v1529, 128
    %1538 = vxpose.xlu0.c.b16.cont [6/8] %v1530, 128
    %1539 = vxpose.xlu0.c.b16.cont [7/8] %v1531, 128
    %1540 = vxpose.xlu0.c.b16.end [8/8] %v1532, 128
    %v1541 = vpop.trf.xlu0
    %v1542 = vpop.trf.xlu0
    %v1543 = vpop.trf.xlu0
    %v1544 = vpop.trf.xlu0
    %v1545 = vpop.trf.xlu0
    %v1546 = vpop.trf.xlu0
    %v1547 = vpop.trf.xlu0
    %v1548 = vpop.trf.xlu0
    %v1549 = vunpack.c.l.bf16 %v1541
    %v1550 = vunpack.c.h.bf16 %v1541
    %v1551 = vunpack.c.l.bf16 %v1542
    %v1552 = vunpack.c.h.bf16 %v1542
    %1553 = vst [vmem:[#allocation2] sm:$0xff] %v1549
    %1554 = vst [vmem:[#allocation2 + $0x8] sm:$0xff] %v1550
    %1555 = vst [vmem:[#allocation2 + $0x10] sm:$0xff] %v1551
    %1556 = vst [vmem:[#allocation2 + $0x18] sm:$0xff] %v1552
    // Predicated region
    $region42: #{tpu_custom_call.1} parent=1 // pred_check
      _
    $region43: #{tpu_custom_call.1} parent=1 // pred_check_branch
      %1558 = sbr.rel (0) target = $region45
    $region44: #{tpu_custom_call.1} parent=1 // pred_region
      %s1560 = ssub.s32 512, 512
      %1561 = vsyncadd [#allocation3], %s1560
      %s1562 = sshll.u32 [#allocation2], 4
      %s1563 = int_to_ptr.vmem [resolvable:$true] %s1562
      %1568 = dma.vmem_to_hbm [thread:$0]  %s1563, 512, %s10, [#allocation3], 128, 128, 8
    $region45: #{tpu_custom_call.1} parent=1 // pred_fallthru
      _
    // Predicated region
    $region46: #{tpu_custom_call.1} parent=1 // pred_check
      _
    $region47: #{tpu_custom_call.1} parent=1 // pred_check_branch
      %1570 = sbr.rel (0) target = $region49
    $region48: #{tpu_custom_call.1} parent=1 // pred_region
      %1571 = dma.done [#allocation3], 512
    $region49: #{tpu_custom_call.1} parent=1 // pred_fallthru
      _
    %1572 = vsyncpa [#allocation3], 1

</llo_original>
